<compile_context>
chip_gen: v7x
topology: tpu7x:2x2x1
jax: 0.10.0
libtpu: 0.0.40
codegen_flags: <defaults>
</compile_context>

<pallas_src>
import functools

import numpy as np
import jax
import jax.numpy as jnp
from jax.experimental import pallas as pl
from jax.experimental.pallas import tpu as pltpu

IN_CHANNELS = 4
NUM_NODES = 16
HIDDEN_DIM = 32
BATCH = 2
SEQ_T = 8
BN_EPS = 1e-5


def stgcn_kernel(x_ref, A_ref,
                 w1_ref, b1_ref,
                 w2_ref, b2_ref,
                 bn2s_ref, bn2b_ref,
                 wt1_ref, bt1_ref,
                 wt2_ref, bt2_ref,
                 wr_ref, br_ref,
                 o_ref, *, V, TV):
    """Single invocation: the whole (tiny) problem lives in VMEM."""
    f32 = jnp.float32
    bf16 = jnp.bfloat16

    # ---- spatial aggregation over nodes, lane-dense:
    #      (B*C, T*V) @ kron(I_T, softmax(A))  -> (B*C, T*V)
    xa = jnp.dot(x_ref[...], A_ref[...], preferred_element_type=f32)

    # ---- spatial_conv1 (Linear C->H) + ReLU  (BN1 folded into w2 upstream)
    z = jnp.dot(w1_ref[...], xa.astype(bf16), preferred_element_type=f32)
    z = jnp.maximum(z + b1_ref[...], 0.0)                      # (B*H, T*V)

    # ---- spatial_conv2 (Linear H->H, BN1-folded) + ReLU + BN2 (eval affine)
    z = jnp.dot(w2_ref[...], z.astype(bf16), preferred_element_type=f32)
    z = jnp.maximum(z + b2_ref[...], 0.0)
    z = z * bn2s_ref[...] + bn2b_ref[...]                      # (B*H, T*V)
    # (dropout: identity in eval mode)

    # ---- temporal Conv2d kernel_size=(3,1), padding=(1,0) ----
    # In the (rows, T*V) layout a shift of +/-1 along T is a shift of +/-V
    # lanes with zero fill at the sequence boundaries.  jnp.roll (static
    # shift -> two lane slices + concat) plus an iota mask implements the
    # zero padding; the three taps are merged into one K=3*B*H matmul.
    rows = z.shape[0]
    lane = jax.lax.broadcasted_iota(jnp.int32, (rows, TV), 1)
    prev_keep = lane >= V              # t-1 invalid at t == 0
    next_keep = lane < TV - V          # t+1 invalid at t == T-1

    def temporal_conv(feat, w_ref, b_ref):
        prev = jnp.where(prev_keep, jnp.roll(feat, V, axis=1), 0.0)
        nxt = jnp.where(next_keep, jnp.roll(feat, -V, axis=1), 0.0)
        stacked = jnp.concatenate([prev, feat, nxt], axis=0).astype(bf16)
        out = jnp.dot(w_ref[...], stacked, preferred_element_type=f32)
        return out + b_ref[...]

    y = temporal_conv(z, wt1_ref, bt1_ref)                     # (B*H, T*V)
    y = temporal_conv(y, wt2_ref, bt2_ref)                     # (B*H, T*V)

    # ---- refine (Linear H->C) ----
    out = jnp.dot(wr_ref[...], y.astype(bf16), preferred_element_type=f32)
    o_ref[...] = (out + br_ref[...]).astype(o_ref.dtype)       # (B*C, T*V)


@jax.jit
def stgcn_forward(x, p):
    """x: (B, C, T, V) float32; returns (B, C, T, V) — matches PyTorch STGCN."""
    B, C, T, V = x.shape
    H = p["w1"].shape[0]
    TV = T * V
    bf16 = jnp.bfloat16

    # ---- parameter-only prep, hoisted out of the kernel (fused by XLA) ----
    S = jax.nn.softmax(p["A"], axis=-1)                         # (V, V)
    A_big = jnp.kron(jnp.eye(T, dtype=jnp.float32), S)          # (TV, TV)

    bn1_scale = p["bn1_gamma"] / jnp.sqrt(p["bn1_var"] + BN_EPS)
    bn1_shift = p["bn1_beta"] - p["bn1_mean"] * bn1_scale
    bn2_scale = p["bn2_gamma"] / jnp.sqrt(p["bn2_var"] + BN_EPS)
    bn2_shift = p["bn2_beta"] - p["bn2_mean"] * bn2_scale

    # fold BN1 (post-ReLU eval affine) into spatial_conv2 — exact
    w2f = p["w2"] * bn1_scale[None, :]
    b2f = p["b2"] + p["w2"] @ bn1_shift

    eyeB = jnp.eye(B, dtype=jnp.float32)

    def blockdiag(w):                 # (out, in) -> (B*out, B*in)
        return jnp.kron(eyeB, w)

    def tile_col(v):                  # (n,) -> (B*n, 1), batch-major rows
        return jnp.tile(v, B).reshape(B * v.shape[0], 1)

    w1b = blockdiag(p["w1"])                                    # (B*H, B*C)
    w2b = blockdiag(w2f)                                        # (B*H, B*H)
    wrb = blockdiag(p["wr"])                                    # (B*C, B*H)
    # temporal taps: k=0 -> t-1 (prev), k=1 -> t (cur), k=2 -> t+1 (next)
    wt1b = jnp.concatenate(
        [blockdiag(p["wt1"][:, :, k, 0]) for k in range(3)], axis=1)  # (B*H, 3*B*H)
    wt2b = jnp.concatenate(
        [blockdiag(p["wt2"][:, :, k, 0]) for k in range(3)], axis=1)

    x_flat = x.reshape(B * C, TV)                               # free view

    vmem = pl.BlockSpec(memory_space=pltpu.MemorySpace.VMEM)
    kernel = functools.partial(stgcn_kernel, V=V, TV=TV)
    out_flat = pl.pallas_call(
        kernel,
        out_shape=jax.ShapeDtypeStruct((B * C, TV), jnp.float32),
        in_specs=[vmem] * 14,
        out_specs=vmem,
    )(
        x_flat.astype(bf16), A_big.astype(bf16),
        w1b.astype(bf16), tile_col(p["b1"]),
        w2b.astype(bf16), tile_col(b2f),
        tile_col(bn2_scale), tile_col(bn2_shift),
        wt1b.astype(bf16), tile_col(p["bt1"]),
        wt2b.astype(bf16), tile_col(p["bt2"]),
        wrb.astype(bf16), tile_col(p["br"]),
    )
    return out_flat.reshape(B, C, T, V)


def stgcn_reference(x, p):
    """Pure-JAX (float32) mirror of the PyTorch forward (eval mode)."""
    B, C, T, V = x.shape
    A = jax.nn.softmax(p["A"], axis=-1)
    h = jnp.transpose(x, (0, 2, 1, 3))                          # B,T,C,V
    h = jnp.matmul(h, A)
    h = jnp.transpose(h, (0, 1, 3, 2))                          # B,T,V,C
    z = jnp.maximum(h @ p["w1"].T + p["b1"], 0.0)
    z = (z - p["bn1_mean"]) * (p["bn1_gamma"] / jnp.sqrt(p["bn1_var"] + BN_EPS)) + p["bn1_beta"]
    z = jnp.maximum(z @ p["w2"].T + p["b2"], 0.0)
    z = (z - p["bn2_mean"]) * (p["bn2_gamma"] / jnp.sqrt(p["bn2_var"] + BN_EPS)) + p["bn2_beta"]
    u = jnp.transpose(z, (0, 3, 1, 2))                          # B,H,T,V

    def tconv(u, w, b):
        up = jnp.pad(u, ((0, 0), (0, 0), (1, 1), (0, 0)))
        out = sum(jnp.einsum("oi,bitv->botv", w[:, :, k, 0], up[:, :, k:k + T, :])
                  for k in range(3))
        return out + b[None, :, None, None]

    y = tconv(u, p["wt1"], p["bt1"])
    y = tconv(y, p["wt2"], p["bt2"])
    y = jnp.transpose(y, (0, 2, 3, 1))                          # B,T,V,H
    out = y @ p["wr"].T + p["br"]                               # B,T,V,C
    return jnp.transpose(out, (0, 3, 1, 2))                     # B,C,T,V


def init_params(key, C, V, H):
    ks = jax.random.split(key, 12)

    def dense(k, shape, scale=0.1):
        return (scale * jax.random.normal(k, shape)).astype(jnp.float32)

    return {
        "A": (jnp.eye(V, dtype=jnp.float32)
              + 0.01 * jax.random.normal(ks[0], (V, V))).astype(jnp.float32),
        "w1": dense(ks[1], (H, C)), "b1": dense(ks[2], (H,)),
        "w2": dense(ks[3], (H, H)), "b2": dense(ks[4], (H,)),
        "wt1": dense(ks[5], (H, H, 3, 1)), "bt1": dense(ks[6], (H,)),
        "wt2": dense(ks[7], (H, H, 3, 1)), "bt2": dense(ks[8], (H,)),
        "wr": dense(ks[9], (C, H)), "br": dense(ks[10], (C,)),
        # BatchNorm1d defaults (fresh module, eval mode)
        "bn1_gamma": jnp.ones((H,), jnp.float32), "bn1_beta": jnp.zeros((H,), jnp.float32),
        "bn1_mean": jnp.zeros((H,), jnp.float32), "bn1_var": jnp.ones((H,), jnp.float32),
        "bn2_gamma": jnp.ones((H,), jnp.float32), "bn2_beta": jnp.zeros((H,), jnp.float32),
        "bn2_mean": jnp.zeros((H,), jnp.float32), "bn2_var": jnp.ones((H,), jnp.float32),
    }


if __name__ == "__main__":
    key = jax.random.PRNGKey(0)
    kx, kp = jax.random.split(key)
    params = init_params(kp, IN_CHANNELS, NUM_NODES, HIDDEN_DIM)
    x = jax.random.normal(kx, (BATCH, IN_CHANNELS, SEQ_T, NUM_NODES), jnp.float32)

    out = stgcn_forward(x, params)
    out = jax.block_until_ready(out)

    assert out.shape == (BATCH, IN_CHANNELS, SEQ_T, NUM_NODES)
    ref = stgcn_reference(x, params)
    # tolerance accounts for bf16 matmul operands (f32 accumulation)
    np.testing.assert_allclose(np.asarray(out), np.asarray(ref), rtol=2e-2, atol=2e-2)
    print("KERNEL_OK")
</pallas_src>

<mosaic_0001>
module attributes {stable_mosaic.version = 11 : i64} {
  func.func @stgcn_kernel(%arg0: memref<8x128xbf16, #tpu.memory_space<vmem>>, %arg1: memref<128x128xbf16, #tpu.memory_space<vmem>>, %arg2: memref<64x8xbf16, #tpu.memory_space<vmem>>, %arg3: memref<64x1xf32, #tpu.memory_space<vmem>>, %arg4: memref<64x64xbf16, #tpu.memory_space<vmem>>, %arg5: memref<64x1xf32, #tpu.memory_space<vmem>>, %arg6: memref<64x1xf32, #tpu.memory_space<vmem>>, %arg7: memref<64x1xf32, #tpu.memory_space<vmem>>, %arg8: memref<64x192xbf16, #tpu.memory_space<vmem>>, %arg9: memref<64x1xf32, #tpu.memory_space<vmem>>, %arg10: memref<64x192xbf16, #tpu.memory_space<vmem>>, %arg11: memref<64x1xf32, #tpu.memory_space<vmem>>, %arg12: memref<8x64xbf16, #tpu.memory_space<vmem>>, %arg13: memref<8x1xf32, #tpu.memory_space<vmem>>, %arg14: memref<8x128xf32, #tpu.memory_space<vmem>>) attributes {dimension_semantics = [], scalar_prefetch = 0 : i64, scratch_operands = 0 : i64, tpu.core_type = #tpu.core_type<tc>} {
    %c0 = arith.constant 0 : index
    %c0_0 = arith.constant 0 : index
    %0 = vector.load %arg0[%c0, %c0_0] : memref<8x128xbf16, #tpu.memory_space<vmem>>, vector<8x128xbf16>
    %c0_1 = arith.constant 0 : index
    %c0_2 = arith.constant 0 : index
    %1 = vector.load %arg1[%c0_1, %c0_2] : memref<128x128xbf16, #tpu.memory_space<vmem>>, vector<128x128xbf16>
    %cst = arith.constant dense<0.000000e+00> : vector<8x128xf32>
    %2 = tpu.matmul %0, %1, %cst {dimension_numbers = #tpu.dot_dimension_numbers<[1], [0], [0], [1], [0, 0, 1, 1], [], []>} : vector<8x128xbf16>, vector<128x128xbf16>, vector<8x128xf32> -> vector<8x128xf32>
    %c0_3 = arith.constant 0 : index
    %c0_4 = arith.constant 0 : index
    %3 = vector.load %arg2[%c0_3, %c0_4] : memref<64x8xbf16, #tpu.memory_space<vmem>>, vector<64x8xbf16>
    %4 = arith.truncf %2 : vector<8x128xf32> to vector<8x128xbf16>
    %cst_5 = arith.constant dense<0.000000e+00> : vector<64x128xf32>
    %5 = tpu.matmul %3, %4, %cst_5 {dimension_numbers = #tpu.dot_dimension_numbers<[1], [0], [0], [1], [0, 0, 1, 1], [], []>} : vector<64x8xbf16>, vector<8x128xbf16>, vector<64x128xf32> -> vector<64x128xf32>
    %c0_6 = arith.constant 0 : index
    %c0_7 = arith.constant 0 : index
    %6 = vector.load %arg3[%c0_6, %c0_7] : memref<64x1xf32, #tpu.memory_space<vmem>>, vector<64x1xf32>
    %7 = vector.broadcast %6 : vector<64x1xf32> to vector<64x128xf32>
    %8 = arith.addf %5, %7 : vector<64x128xf32>
    %cst_8 = arith.constant 0.000000e+00 : f32
    %9 = vector.broadcast %cst_8 : f32 to vector<64x128xf32>
    %10 = arith.maximumf %8, %9 : vector<64x128xf32>
    %c0_9 = arith.constant 0 : index
    %c0_10 = arith.constant 0 : index
    %11 = vector.load %arg4[%c0_9, %c0_10] : memref<64x64xbf16, #tpu.memory_space<vmem>>, vector<64x64xbf16>
    %12 = arith.truncf %10 : vector<64x128xf32> to vector<64x128xbf16>
    %cst_11 = arith.constant dense<0.000000e+00> : vector<64x128xf32>
    %13 = tpu.matmul %11, %12, %cst_11 {dimension_numbers = #tpu.dot_dimension_numbers<[1], [0], [0], [1], [0, 0, 1, 1], [], []>} : vector<64x64xbf16>, vector<64x128xbf16>, vector<64x128xf32> -> vector<64x128xf32>
    %c0_12 = arith.constant 0 : index
    %c0_13 = arith.constant 0 : index
    %14 = vector.load %arg5[%c0_12, %c0_13] : memref<64x1xf32, #tpu.memory_space<vmem>>, vector<64x1xf32>
    %15 = vector.broadcast %14 : vector<64x1xf32> to vector<64x128xf32>
    %16 = arith.addf %13, %15 : vector<64x128xf32>
    %cst_14 = arith.constant 0.000000e+00 : f32
    %17 = vector.broadcast %cst_14 : f32 to vector<64x128xf32>
    %18 = arith.maximumf %16, %17 : vector<64x128xf32>
    %c0_15 = arith.constant 0 : index
    %c0_16 = arith.constant 0 : index
    %19 = vector.load %arg6[%c0_15, %c0_16] : memref<64x1xf32, #tpu.memory_space<vmem>>, vector<64x1xf32>
    %20 = vector.broadcast %19 : vector<64x1xf32> to vector<64x128xf32>
    %21 = arith.mulf %18, %20 : vector<64x128xf32>
    %c0_17 = arith.constant 0 : index
    %c0_18 = arith.constant 0 : index
    %22 = vector.load %arg7[%c0_17, %c0_18] : memref<64x1xf32, #tpu.memory_space<vmem>>, vector<64x1xf32>
    %23 = vector.broadcast %22 : vector<64x1xf32> to vector<64x128xf32>
    %24 = arith.addf %21, %23 : vector<64x128xf32>
    %25 = tpu.iota {dimensions = array<i32: 1>} : vector<64x128xi32>
    %c16_i32 = arith.constant 16 : i32
    %26 = vector.broadcast %c16_i32 : i32 to vector<64x128xi32>
    %27 = arith.cmpi sge, %25, %26 : vector<64x128xi32>
    %c112_i32 = arith.constant 112 : i32
    %28 = vector.broadcast %c112_i32 : i32 to vector<64x128xi32>
    %29 = arith.cmpi slt, %25, %28 : vector<64x128xi32>
    %30 = vector.extract_strided_slice %24 {offsets = [0, 112], sizes = [64, 16], strides = [1, 1]} : vector<64x128xf32> to vector<64x16xf32>
    %31 = vector.extract_strided_slice %24 {offsets = [0, 0], sizes = [64, 112], strides = [1, 1]} : vector<64x128xf32> to vector<64x112xf32>
    %32 = tpu.concatenate %30, %31 in 1 : vector<64x16xf32>, vector<64x112xf32> -> vector<64x128xf32>
    %cst_19 = arith.constant 0.000000e+00 : f32
    %33 = vector.broadcast %cst_19 : f32 to vector<64x128xf32>
    %34 = arith.select %27, %32, %33 : vector<64x128xi1>, vector<64x128xf32>
    %35 = vector.extract_strided_slice %24 {offsets = [0, 16], sizes = [64, 112], strides = [1, 1]} : vector<64x128xf32> to vector<64x112xf32>
    %36 = vector.extract_strided_slice %24 {offsets = [0, 0], sizes = [64, 16], strides = [1, 1]} : vector<64x128xf32> to vector<64x16xf32>
    %37 = tpu.concatenate %35, %36 in 1 : vector<64x112xf32>, vector<64x16xf32> -> vector<64x128xf32>
    %cst_20 = arith.constant 0.000000e+00 : f32
    %38 = vector.broadcast %cst_20 : f32 to vector<64x128xf32>
    %39 = arith.select %29, %37, %38 : vector<64x128xi1>, vector<64x128xf32>
    %40 = tpu.concatenate %34, %24, %39 in 0 : vector<64x128xf32>, vector<64x128xf32>, vector<64x128xf32> -> vector<192x128xf32>
    %41 = arith.truncf %40 : vector<192x128xf32> to vector<192x128xbf16>
    %c0_21 = arith.constant 0 : index
    %c0_22 = arith.constant 0 : index
    %42 = vector.load %arg8[%c0_21, %c0_22] : memref<64x192xbf16, #tpu.memory_space<vmem>>, vector<64x192xbf16>
    %cst_23 = arith.constant dense<0.000000e+00> : vector<64x128xf32>
    %43 = tpu.matmul %42, %41, %cst_23 {dimension_numbers = #tpu.dot_dimension_numbers<[1], [0], [0], [1], [0, 0, 1, 1], [], []>} : vector<64x192xbf16>, vector<192x128xbf16>, vector<64x128xf32> -> vector<64x128xf32>
    %c0_24 = arith.constant 0 : index
    %c0_25 = arith.constant 0 : index
    %44 = vector.load %arg9[%c0_24, %c0_25] : memref<64x1xf32, #tpu.memory_space<vmem>>, vector<64x1xf32>
    %45 = vector.broadcast %44 : vector<64x1xf32> to vector<64x128xf32>
    %46 = arith.addf %43, %45 : vector<64x128xf32>
    %47 = vector.extract_strided_slice %46 {offsets = [0, 112], sizes = [64, 16], strides = [1, 1]} : vector<64x128xf32> to vector<64x16xf32>
    %48 = vector.extract_strided_slice %46 {offsets = [0, 0], sizes = [64, 112], strides = [1, 1]} : vector<64x128xf32> to vector<64x112xf32>
    %49 = tpu.concatenate %47, %48 in 1 : vector<64x16xf32>, vector<64x112xf32> -> vector<64x128xf32>
    %cst_26 = arith.constant 0.000000e+00 : f32
    %50 = vector.broadcast %cst_26 : f32 to vector<64x128xf32>
    %51 = arith.select %27, %49, %50 : vector<64x128xi1>, vector<64x128xf32>
    %52 = vector.extract_strided_slice %46 {offsets = [0, 16], sizes = [64, 112], strides = [1, 1]} : vector<64x128xf32> to vector<64x112xf32>
    %53 = vector.extract_strided_slice %46 {offsets = [0, 0], sizes = [64, 16], strides = [1, 1]} : vector<64x128xf32> to vector<64x16xf32>
    %54 = tpu.concatenate %52, %53 in 1 : vector<64x112xf32>, vector<64x16xf32> -> vector<64x128xf32>
    %cst_27 = arith.constant 0.000000e+00 : f32
    %55 = vector.broadcast %cst_27 : f32 to vector<64x128xf32>
    %56 = arith.select %29, %54, %55 : vector<64x128xi1>, vector<64x128xf32>
    %57 = tpu.concatenate %51, %46, %56 in 0 : vector<64x128xf32>, vector<64x128xf32>, vector<64x128xf32> -> vector<192x128xf32>
    %58 = arith.truncf %57 : vector<192x128xf32> to vector<192x128xbf16>
    %c0_28 = arith.constant 0 : index
    %c0_29 = arith.constant 0 : index
    %59 = vector.load %arg10[%c0_28, %c0_29] : memref<64x192xbf16, #tpu.memory_space<vmem>>, vector<64x192xbf16>
    %cst_30 = arith.constant dense<0.000000e+00> : vector<64x128xf32>
    %60 = tpu.matmul %59, %58, %cst_30 {dimension_numbers = #tpu.dot_dimension_numbers<[1], [0], [0], [1], [0, 0, 1, 1], [], []>} : vector<64x192xbf16>, vector<192x128xbf16>, vector<64x128xf32> -> vector<64x128xf32>
    %c0_31 = arith.constant 0 : index
    %c0_32 = arith.constant 0 : index
    %61 = vector.load %arg11[%c0_31, %c0_32] : memref<64x1xf32, #tpu.memory_space<vmem>>, vector<64x1xf32>
    %62 = vector.broadcast %61 : vector<64x1xf32> to vector<64x128xf32>
    %63 = arith.addf %60, %62 : vector<64x128xf32>
    %c0_33 = arith.constant 0 : index
    %c0_34 = arith.constant 0 : index
    %64 = vector.load %arg12[%c0_33, %c0_34] : memref<8x64xbf16, #tpu.memory_space<vmem>>, vector<8x64xbf16>
    %65 = arith.truncf %63 : vector<64x128xf32> to vector<64x128xbf16>
    %cst_35 = arith.constant dense<0.000000e+00> : vector<8x128xf32>
    %66 = tpu.matmul %64, %65, %cst_35 {dimension_numbers = #tpu.dot_dimension_numbers<[1], [0], [0], [1], [0, 0, 1, 1], [], []>} : vector<8x64xbf16>, vector<64x128xbf16>, vector<8x128xf32> -> vector<8x128xf32>
    %c0_36 = arith.constant 0 : index
    %c0_37 = arith.constant 0 : index
    %67 = vector.load %arg13[%c0_36, %c0_37] : memref<8x1xf32, #tpu.memory_space<vmem>>, vector<8x1xf32>
    %68 = vector.broadcast %67 : vector<8x1xf32> to vector<8x128xf32>
    %69 = arith.addf %66, %68 : vector<8x128xf32>
    %c0_38 = arith.constant 0 : index
    %c0_39 = arith.constant 0 : index
    %70 = vector.load %arg14[%c0_38, %c0_39] : memref<8x128xf32, #tpu.memory_space<vmem>>, vector<8x128xf32>
    tpu.vector_store %arg14[%c0_38, %c0_39], %69 {strides = array<i32>} : memref<8x128xf32, #tpu.memory_space<vmem>>, vector<8x128xf32>,
    return
  }
}

</mosaic_0001>

<llo_original>
// kernel: tile.43
$region0: #{tile.43}
  #allocation0 [shape = 's32[1]{0}', space=sflag, size = 0x4, scoped, tag = 'scoped memory for tile.43']
  %s0 = inlined_call_operand.vmem [shape: f32[32], index: 0, kind: input, shape index: {}]
  %s1 = inlined_call_operand.vmem [shape: f32[2,32], index: 1, kind: output, shape index: {}]
  // Predicated region
  $region2: #{tile.43} parent=0 // pred_check
    _
  $region3: #{tile.43} parent=0 // pred_check_branch
    %3 = sbr.rel (0) target = $region5
  $region4: #{tile.43} parent=0 // pred_region
    _
  $region5: #{tile.43} parent=0 // pred_fallthru
    _
  %v4 = vld [vmem:[%s0] ss:$0 sm:$0xff]
  %5 = vst [vmem:[%s1] sm:$0x3] %v4

// kernel: tile.1
$region0: #{tile.1}
  %s0 = inlined_call_operand.vmem [shape: f32[2,32], index: 0, kind: input, shape index: {}]
  %s1 = inlined_call_operand.vmem [shape: f32[64,1], index: 1, kind: output, shape index: {}]
  $region1: #{tile.1} parent=0
    #allocation0 [shape = 'u8[4096]{0}', space=vmem, size = 0x1000, scoped, tag = 'scoped mem for input reshape']
    %s3 = sshllo.u32 0, 2
    %v4 = vld [vmem:[%s0] sm:%s3]
    %5 = vst [vmem:[#allocation0] sm:%s3] %v4
    %v6 = vld [vmem:[#allocation0] sm:$0x3]
    %vm7 = vcmask 7168
    %8 = vst.msk [vmem:[%s1] sm:$0x1] %vm7, %v6
    %s9 = scalar_lea.vmem %s1, 31
    %10 = vst.msk [vmem:[%s9] sm:$0x2] %vm7, %v6
    %v11 = vld [vmem:[#allocation0] sm:$0x3]
    %12 = vrot.lane.b32.xlu0 %v11, 127
    %v13 = vpop.permute.xlu0 %12
    %vm14 = vcmask 7168
    %s15 = scalar_lea.vmem %s1, 1
    %16 = vst.msk [vmem:[%s15] sm:$0x1] %vm14, %v13
    %s17 = scalar_lea.vmem %s1, 32
    %18 = vst.msk [vmem:[%s17] sm:$0x2] %vm14, %v13
    %v19 = vld [vmem:[#allocation0] sm:$0x3]
    %20 = vrot.lane.b32.xlu0 %v19, 126
    %v21 = vpop.permute.xlu0 %20
    %vm22 = vcmask 7168
    %s23 = scalar_lea.vmem %s1, 2
    %24 = vst.msk [vmem:[%s23] sm:$0x1] %vm22, %v21
    %s25 = scalar_lea.vmem %s1, 33
    %26 = vst.msk [vmem:[%s25] sm:$0x2] %vm22, %v21
    %v27 = vld [vmem:[#allocation0] sm:$0x3]
    %28 = vrot.lane.b32.xlu0 %v27, 125
    %v29 = vpop.permute.xlu0 %28
    %vm30 = vcmask 7168
    %s31 = scalar_lea.vmem %s1, 3
    %32 = vst.msk [vmem:[%s31] sm:$0x1] %vm30, %v29
    %s33 = scalar_lea.vmem %s1, 34
    %34 = vst.msk [vmem:[%s33] sm:$0x2] %vm30, %v29
    %v35 = vld [vmem:[#allocation0] sm:$0x3]
    %36 = vrot.lane.b32.xlu0 %v35, 124
    %v37 = vpop.permute.xlu0 %36
    %vm38 = vcmask 7168
    %s39 = scalar_lea.vmem %s1, 4
    %40 = vst.msk [vmem:[%s39] sm:$0x1] %vm38, %v37
    %s41 = scalar_lea.vmem %s1, 35
    %42 = vst.msk [vmem:[%s41] sm:$0x2] %vm38, %v37
    %v43 = vld [vmem:[#allocation0] sm:$0x3]
    %44 = vrot.lane.b32.xlu0 %v43, 123
    %v45 = vpop.permute.xlu0 %44
    %vm46 = vcmask 7168
    %s47 = scalar_lea.vmem %s1, 5
    %48 = vst.msk [vmem:[%s47] sm:$0x1] %vm46, %v45
    %s49 = scalar_lea.vmem %s1, 36
    %50 = vst.msk [vmem:[%s49] sm:$0x2] %vm46, %v45
    %v51 = vld [vmem:[#allocation0] sm:$0x3]
    %52 = vrot.lane.b32.xlu0 %v51, 122
    %v53 = vpop.permute.xlu0 %52
    %vm54 = vcmask 7168
    %s55 = scalar_lea.vmem %s1, 6
    %56 = vst.msk [vmem:[%s55] sm:$0x1] %vm54, %v53
    %s57 = scalar_lea.vmem %s1, 37
    %58 = vst.msk [vmem:[%s57] sm:$0x2] %vm54, %v53
    %v59 = vld [vmem:[#allocation0] sm:$0x3]
    %60 = vrot.lane.b32.xlu0 %v59, 121
    %v61 = vpop.permute.xlu0 %60
    %vm62 = vcmask 7168
    %s63 = scalar_lea.vmem %s1, 7
    %64 = vst.msk [vmem:[%s63] sm:$0x1] %vm62, %v61
    %s65 = scalar_lea.vmem %s1, 38
    %66 = vst.msk [vmem:[%s65] sm:$0x2] %vm62, %v61
    %v67 = vld [vmem:[#allocation0] sm:$0x3]
    %68 = vrot.lane.b32.xlu0 %v67, 120
    %v69 = vpop.permute.xlu0 %68
    %vm70 = vcmask 7168
    %s71 = scalar_lea.vmem %s1, 8
    %72 = vst.msk [vmem:[%s71] sm:$0x1] %vm70, %v69
    %s73 = scalar_lea.vmem %s1, 39
    %74 = vst.msk [vmem:[%s73] sm:$0x2] %vm70, %v69
    %v75 = vld [vmem:[#allocation0] sm:$0x3]
    %76 = vrot.lane.b32.xlu0 %v75, 119
    %v77 = vpop.permute.xlu0 %76
    %vm78 = vcmask 7168
    %s79 = scalar_lea.vmem %s1, 9
    %80 = vst.msk [vmem:[%s79] sm:$0x1] %vm78, %v77
    %s81 = scalar_lea.vmem %s1, 40
    %82 = vst.msk [vmem:[%s81] sm:$0x2] %vm78, %v77
    %v83 = vld [vmem:[#allocation0] sm:$0x3]
    %84 = vrot.lane.b32.xlu0 %v83, 118
    %v85 = vpop.permute.xlu0 %84
    %vm86 = vcmask 7168
    %s87 = scalar_lea.vmem %s1, 10
    %88 = vst.msk [vmem:[%s87] sm:$0x1] %vm86, %v85
    %s89 = scalar_lea.vmem %s1, 41
    %90 = vst.msk [vmem:[%s89] sm:$0x2] %vm86, %v85
    %v91 = vld [vmem:[#allocation0] sm:$0x3]
    %92 = vrot.lane.b32.xlu0 %v91, 117
    %v93 = vpop.permute.xlu0 %92
    %vm94 = vcmask 7168
    %s95 = scalar_lea.vmem %s1, 11
    %96 = vst.msk [vmem:[%s95] sm:$0x1] %vm94, %v93
    %s97 = scalar_lea.vmem %s1, 42
    %98 = vst.msk [vmem:[%s97] sm:$0x2] %vm94, %v93
    %v99 = vld [vmem:[#allocation0] sm:$0x3]
    %100 = vrot.lane.b32.xlu0 %v99, 116
    %v101 = vpop.permute.xlu0 %100
    %vm102 = vcmask 7168
    %s103 = scalar_lea.vmem %s1, 12
    %104 = vst.msk [vmem:[%s103] sm:$0x1] %vm102, %v101
    %s105 = scalar_lea.vmem %s1, 43
    %106 = vst.msk [vmem:[%s105] sm:$0x2] %vm102, %v101
    %v107 = vld [vmem:[#allocation0] sm:$0x3]
    %108 = vrot.lane.b32.xlu0 %v107, 115
    %v109 = vpop.permute.xlu0 %108
    %vm110 = vcmask 7168
    %s111 = scalar_lea.vmem %s1, 13
    %112 = vst.msk [vmem:[%s111] sm:$0x1] %vm110, %v109
    %s113 = scalar_lea.vmem %s1, 44
    %114 = vst.msk [vmem:[%s113] sm:$0x2] %vm110, %v109
    %v115 = vld [vmem:[#allocation0] sm:$0x3]
    %116 = vrot.lane.b32.xlu0 %v115, 114
    %v117 = vpop.permute.xlu0 %116
    %vm118 = vcmask 7168
    %s119 = scalar_lea.vmem %s1, 14
    %120 = vst.msk [vmem:[%s119] sm:$0x1] %vm118, %v117
    %s121 = scalar_lea.vmem %s1, 45
    %122 = vst.msk [vmem:[%s121] sm:$0x2] %vm118, %v117
    %v123 = vld [vmem:[#allocation0] sm:$0x3]
    %124 = vrot.lane.b32.xlu0 %v123, 113
    %v125 = vpop.permute.xlu0 %124
    %vm126 = vcmask 7168
    %s127 = scalar_lea.vmem %s1, 15
    %128 = vst.msk [vmem:[%s127] sm:$0x1] %vm126, %v125
    %s129 = scalar_lea.vmem %s1, 46
    %130 = vst.msk [vmem:[%s129] sm:$0x2] %vm126, %v125
    %v131 = vld [vmem:[#allocation0] sm:$0x3]
    %132 = vrot.lane.b32.xlu0 %v131, 112
    %v133 = vpop.permute.xlu0 %132
    %vm134 = vcmask 7168
    %s135 = scalar_lea.vmem %s1, 16
    %136 = vst.msk [vmem:[%s135] sm:$0x1] %vm134, %v133
    %s137 = scalar_lea.vmem %s1, 47
    %138 = vst.msk [vmem:[%s137] sm:$0x2] %vm134, %v133
    %v139 = vld [vmem:[#allocation0] sm:$0x3]
    %140 = vrot.lane.b32.xlu0 %v139, 111
    %v141 = vpop.permute.xlu0 %140
    %vm142 = vcmask 7168
    %s143 = scalar_lea.vmem %s1, 17
    %144 = vst.msk [vmem:[%s143] sm:$0x1] %vm142, %v141
    %s145 = scalar_lea.vmem %s1, 48
    %146 = vst.msk [vmem:[%s145] sm:$0x2] %vm142, %v141
    %v147 = vld [vmem:[#allocation0] sm:$0x3]
    %148 = vrot.lane.b32.xlu0 %v147, 110
    %v149 = vpop.permute.xlu0 %148
    %vm150 = vcmask 7168
    %s151 = scalar_lea.vmem %s1, 18
    %152 = vst.msk [vmem:[%s151] sm:$0x1] %vm150, %v149
    %s153 = scalar_lea.vmem %s1, 49
    %154 = vst.msk [vmem:[%s153] sm:$0x2] %vm150, %v149
    %v155 = vld [vmem:[#allocation0] sm:$0x3]
    %156 = vrot.lane.b32.xlu0 %v155, 109
    %v157 = vpop.permute.xlu0 %156
    %vm158 = vcmask 7168
    %s159 = scalar_lea.vmem %s1, 19
    %160 = vst.msk [vmem:[%s159] sm:$0x1] %vm158, %v157
    %s161 = scalar_lea.vmem %s1, 50
    %162 = vst.msk [vmem:[%s161] sm:$0x2] %vm158, %v157
    %v163 = vld [vmem:[#allocation0] sm:$0x3]
    %164 = vrot.lane.b32.xlu0 %v163, 108
    %v165 = vpop.permute.xlu0 %164
    %vm166 = vcmask 7168
    %s167 = scalar_lea.vmem %s1, 20
    %168 = vst.msk [vmem:[%s167] sm:$0x1] %vm166, %v165
    %s169 = scalar_lea.vmem %s1, 51
    %170 = vst.msk [vmem:[%s169] sm:$0x2] %vm166, %v165
    %v171 = vld [vmem:[#allocation0] sm:$0x3]
    %172 = vrot.lane.b32.xlu0 %v171, 107
    %v173 = vpop.permute.xlu0 %172
    %vm174 = vcmask 7168
    %s175 = scalar_lea.vmem %s1, 21
    %176 = vst.msk [vmem:[%s175] sm:$0x1] %vm174, %v173
    %s177 = scalar_lea.vmem %s1, 52
    %178 = vst.msk [vmem:[%s177] sm:$0x2] %vm174, %v173
    %v179 = vld [vmem:[#allocation0] sm:$0x3]
    %180 = vrot.lane.b32.xlu0 %v179, 106
    %v181 = vpop.permute.xlu0 %180
    %vm182 = vcmask 7168
    %s183 = scalar_lea.vmem %s1, 22
    %184 = vst.msk [vmem:[%s183] sm:$0x1] %vm182, %v181
    %s185 = scalar_lea.vmem %s1, 53
    %186 = vst.msk [vmem:[%s185] sm:$0x2] %vm182, %v181
    %v187 = vld [vmem:[#allocation0] sm:$0x3]
    %188 = vrot.lane.b32.xlu0 %v187, 105
    %v189 = vpop.permute.xlu0 %188
    %vm190 = vcmask 7168
    %s191 = scalar_lea.vmem %s1, 23
    %192 = vst.msk [vmem:[%s191] sm:$0x1] %vm190, %v189
    %s193 = scalar_lea.vmem %s1, 54
    %194 = vst.msk [vmem:[%s193] sm:$0x2] %vm190, %v189
    %v195 = vld [vmem:[#allocation0] sm:$0x3]
    %196 = vrot.lane.b32.xlu0 %v195, 104
    %v197 = vpop.permute.xlu0 %196
    %vm198 = vcmask 7168
    %s199 = scalar_lea.vmem %s1, 24
    %200 = vst.msk [vmem:[%s199] sm:$0x1] %vm198, %v197
    %s201 = scalar_lea.vmem %s1, 55
    %202 = vst.msk [vmem:[%s201] sm:$0x2] %vm198, %v197
    %v203 = vld [vmem:[#allocation0] sm:$0x3]
    %204 = vrot.lane.b32.xlu0 %v203, 103
    %v205 = vpop.permute.xlu0 %204
    %vm206 = vcmask 7168
    %s207 = scalar_lea.vmem %s1, 25
    %208 = vst.msk [vmem:[%s207] sm:$0x1] %vm206, %v205
    %s209 = scalar_lea.vmem %s1, 56
    %210 = vst.msk [vmem:[%s209] sm:$0x2] %vm206, %v205
    %v211 = vld [vmem:[#allocation0] sm:$0x3]
    %212 = vrot.lane.b32.xlu0 %v211, 102
    %v213 = vpop.permute.xlu0 %212
    %vm214 = vcmask 7168
    %s215 = scalar_lea.vmem %s1, 26
    %216 = vst.msk [vmem:[%s215] sm:$0x1] %vm214, %v213
    %s217 = scalar_lea.vmem %s1, 57
    %218 = vst.msk [vmem:[%s217] sm:$0x2] %vm214, %v213
    %v219 = vld [vmem:[#allocation0] sm:$0x3]
    %220 = vrot.lane.b32.xlu0 %v219, 101
    %v221 = vpop.permute.xlu0 %220
    %vm222 = vcmask 7168
    %s223 = scalar_lea.vmem %s1, 27
    %224 = vst.msk [vmem:[%s223] sm:$0x1] %vm222, %v221
    %s225 = scalar_lea.vmem %s1, 58
    %226 = vst.msk [vmem:[%s225] sm:$0x2] %vm222, %v221
    %v227 = vld [vmem:[#allocation0] sm:$0x3]
    %228 = vrot.lane.b32.xlu0 %v227, 100
    %v229 = vpop.permute.xlu0 %228
    %vm230 = vcmask 7168
    %s231 = scalar_lea.vmem %s1, 28
    %232 = vst.msk [vmem:[%s231] sm:$0x1] %vm230, %v229
    %s233 = scalar_lea.vmem %s1, 59
    %234 = vst.msk [vmem:[%s233] sm:$0x2] %vm230, %v229
    %v235 = vld [vmem:[#allocation0] sm:$0x3]
    %236 = vrot.lane.b32.xlu0 %v235, 99
    %v237 = vpop.permute.xlu0 %236
    %vm238 = vcmask 7168
    %s239 = scalar_lea.vmem %s1, 29
    %240 = vst.msk [vmem:[%s239] sm:$0x1] %vm238, %v237
    %s241 = scalar_lea.vmem %s1, 60
    %242 = vst.msk [vmem:[%s241] sm:$0x2] %vm238, %v237
    %v243 = vld [vmem:[#allocation0] sm:$0x3]
    %244 = vrot.lane.b32.xlu0 %v243, 98
    %v245 = vpop.permute.xlu0 %244
    %vm246 = vcmask 7168
    %s247 = scalar_lea.vmem %s1, 30
    %248 = vst.msk [vmem:[%s247] sm:$0x1] %vm246, %v245
    %s249 = scalar_lea.vmem %s1, 61
    %250 = vst.msk [vmem:[%s249] sm:$0x2] %vm246, %v245
    %v251 = vld [vmem:[#allocation0] sm:$0x3]
    %252 = vrot.lane.b32.xlu0 %v251, 97
    %v253 = vpop.permute.xlu0 %252
    %vm254 = vcmask 7168
    %s255 = scalar_lea.vmem %s1, 31
    %256 = vst.msk [vmem:[%s255] sm:$0x1] %vm254, %v253
    %s257 = scalar_lea.vmem %s1, 62
    %258 = vst.msk [vmem:[%s257] sm:$0x2] %vm254, %v253

// kernel: tile.68
$region0: #{tile.68}
  #allocation0 [shape = 's32[1]{0}', space=sflag, size = 0x4, scoped, tag = 'scoped memory for tile.68']
  %s0 = inlined_call_operand.vmem [shape: f32[4], index: 0, kind: input, shape index: {}]
  %s1 = inlined_call_operand.vmem [shape: f32[2,4], index: 1, kind: output, shape index: {}]
  // Predicated region
  $region2: #{tile.68} parent=0 // pred_check
    _
  $region3: #{tile.68} parent=0 // pred_check_branch
    %3 = sbr.rel (0) target = $region5
  $region4: #{tile.68} parent=0 // pred_region
    _
  $region5: #{tile.68} parent=0 // pred_fallthru
    _
  %v4 = vld [vmem:[%s0] ss:$0 sm:$0xff]
  %5 = vst [vmem:[%s1] sm:$0x3] %v4

// kernel: tile.6
$region0: #{tile.6}
  %s0 = inlined_call_operand.vmem [shape: f32[2,4], index: 0, kind: input, shape index: {}]
  %s1 = inlined_call_operand.vmem [shape: f32[8,1], index: 1, kind: output, shape index: {}]
  $region1: #{tile.6} parent=0
    #allocation0 [shape = 'u8[4096]{0}', space=vmem, size = 0x1000, scoped, tag = 'scoped mem for input reshape']
    %s3 = sshllo.u32 0, 2
    %v4 = vld [vmem:[%s0] sm:%s3]
    %5 = vst [vmem:[#allocation0] sm:%s3] %v4
    %v6 = vld [vmem:[#allocation0] sm:$0x3]
    %vm7 = vcmask 7168
    %8 = vst.msk [vmem:[%s1] ss:$4 sm:$0x3] %vm7, %v6
    %v9 = vld [vmem:[#allocation0] sm:$0x3]
    %10 = vrot.lane.b32.xlu0 %v9, 127
    %v11 = vpop.permute.xlu0 %10
    %vm12 = vcmask 7168
    %s13 = scalar_lea.vmem %s1, 1
    %14 = vst.msk [vmem:[%s13] ss:$4 sm:$0x3] %vm12, %v11
    %v15 = vld [vmem:[#allocation0] sm:$0x3]
    %16 = vrot.lane.b32.xlu0 %v15, 126
    %v17 = vpop.permute.xlu0 %16
    %vm18 = vcmask 7168
    %s19 = scalar_lea.vmem %s1, 2
    %20 = vst.msk [vmem:[%s19] ss:$4 sm:$0x3] %vm18, %v17
    %v21 = vld [vmem:[#allocation0] sm:$0x3]
    %22 = vrot.lane.b32.xlu0 %v21, 125
    %v23 = vpop.permute.xlu0 %22
    %vm24 = vcmask 7168
    %s25 = scalar_lea.vmem %s1, 3
    %26 = vst.msk [vmem:[%s25] ss:$4 sm:$0x3] %vm24, %v23

// kernel: stgcn_forward.1
$region0: #{stgcn_forward.1}
  #allocation0 [shape = 'u32[]', space=smem, size = 0x4, offset = 0x4, fixed_abs, tag = 'smem constant byte address 0x4 - core index']
  #allocation1 [shape = 'u32[144,128]{1,0:T(1,128)}', space=vmem, size = 0x12000, scoped, tag = 'internal scratch']
  %s0 = inlined_call_operand.vmem [shape: bf16[8,128], index: 0, kind: input, shape index: {}]
  %s1 = inlined_call_operand.vmem [shape: bf16[128,128], index: 1, kind: input, shape index: {}]
  %s2 = inlined_call_operand.vmem [shape: bf16[64,8], index: 2, kind: input, shape index: {}]
  %s3 = inlined_call_operand.vmem [shape: f32[64,1], index: 3, kind: input, shape index: {}]
  %s4 = inlined_call_operand.vmem [shape: bf16[64,64], index: 4, kind: input, shape index: {}]
  %s5 = inlined_call_operand.vmem [shape: f32[64,1], index: 5, kind: input, shape index: {}]
  %s6 = inlined_call_operand.vmem [shape: f32[64,1], index: 6, kind: input, shape index: {}]
  %s7 = inlined_call_operand.vmem [shape: f32[64,1], index: 7, kind: input, shape index: {}]
  %s8 = inlined_call_operand.vmem [shape: bf16[64,192], index: 8, kind: input, shape index: {}]
  %s9 = inlined_call_operand.vmem [shape: f32[64,1], index: 9, kind: input, shape index: {}]
  %s10 = inlined_call_operand.vmem [shape: bf16[64,192], index: 10, kind: input, shape index: {}]
  %s11 = inlined_call_operand.vmem [shape: f32[64,1], index: 11, kind: input, shape index: {}]
  %s12 = inlined_call_operand.vmem [shape: bf16[8,64], index: 12, kind: input, shape index: {}]
  %s13 = inlined_call_operand.vmem [shape: f32[8,1], index: 13, kind: input, shape index: {}]
  %s14 = inlined_call_operand.vmem [shape: f32[8,128], index: 14, kind: output, shape index: {}]
  %s15 = sld [smem:[#allocation0]]
  $region66: #{stgcn_forward.1} parent=0
    _
  %s17 = ssub.s32 1, %s15
  %s18 = scalar_select 0, %s17, %s15
  // Predicated region
  $region2: #{stgcn_forward.1} parent=0 // pred_check
    _
  $region3: #{stgcn_forward.1} parent=0 // pred_check_branch
    %20 = sbr.rel (0) target = $region5
  $region4: #{stgcn_forward.1} parent=0 // pred_region
    _
  $region5: #{stgcn_forward.1} parent=0 // pred_fallthru
    _
  // Predicated region
  $region6: #{stgcn_forward.1} parent=0 // pred_check
    _
  $region7: #{stgcn_forward.1} parent=0 // pred_check_branch
    %22 = sbr.rel (0) target = $region9
  $region8: #{stgcn_forward.1} parent=0 // pred_region
    _
  $region9: #{stgcn_forward.1} parent=0 // pred_fallthru
    _
  // Predicated region
  $region10: #{stgcn_forward.1} parent=0 // pred_check
    _
  $region11: #{stgcn_forward.1} parent=0 // pred_check_branch
    %24 = sbr.rel (0) target = $region13
  $region12: #{stgcn_forward.1} parent=0 // pred_region
    _
  $region13: #{stgcn_forward.1} parent=0 // pred_fallthru
    _
  // Predicated region
  $region14: #{stgcn_forward.1} parent=0 // pred_check
    _
  $region15: #{stgcn_forward.1} parent=0 // pred_check_branch
    %26 = sbr.rel (0) target = $region17
  $region16: #{stgcn_forward.1} parent=0 // pred_region
    _
  $region17: #{stgcn_forward.1} parent=0 // pred_fallthru
    _
  // Predicated region
  $region18: #{stgcn_forward.1} parent=0 // pred_check
    _
  $region19: #{stgcn_forward.1} parent=0 // pred_check_branch
    %28 = sbr.rel (0) target = $region21
  $region20: #{stgcn_forward.1} parent=0 // pred_region
    _
  $region21: #{stgcn_forward.1} parent=0 // pred_fallthru
    _
  // Predicated region
  $region22: #{stgcn_forward.1} parent=0 // pred_check
    _
  $region23: #{stgcn_forward.1} parent=0 // pred_check_branch
    %30 = sbr.rel (0) target = $region25
  $region24: #{stgcn_forward.1} parent=0 // pred_region
    _
  $region25: #{stgcn_forward.1} parent=0 // pred_fallthru
    _
  // Predicated region
  $region26: #{stgcn_forward.1} parent=0 // pred_check
    _
  $region27: #{stgcn_forward.1} parent=0 // pred_check_branch
    %32 = sbr.rel (0) target = $region29
  $region28: #{stgcn_forward.1} parent=0 // pred_region
    _
  $region29: #{stgcn_forward.1} parent=0 // pred_fallthru
    _
  // Predicated region
  $region30: #{stgcn_forward.1} parent=0 // pred_check
    _
  $region31: #{stgcn_forward.1} parent=0 // pred_check_branch
    %34 = sbr.rel (0) target = $region33
  $region32: #{stgcn_forward.1} parent=0 // pred_region
    _
  $region33: #{stgcn_forward.1} parent=0 // pred_fallthru
    _
  // Predicated region
  $region34: #{stgcn_forward.1} parent=0 // pred_check
    _
  $region35: #{stgcn_forward.1} parent=0 // pred_check_branch
    %36 = sbr.rel (0) target = $region37
  $region36: #{stgcn_forward.1} parent=0 // pred_region
    _
  $region37: #{stgcn_forward.1} parent=0 // pred_fallthru
    _
  // Predicated region
  $region38: #{stgcn_forward.1} parent=0 // pred_check
    _
  $region39: #{stgcn_forward.1} parent=0 // pred_check_branch
    %38 = sbr.rel (0) target = $region41
  $region40: #{stgcn_forward.1} parent=0 // pred_region
    _
  $region41: #{stgcn_forward.1} parent=0 // pred_fallthru
    _
  // Predicated region
  $region42: #{stgcn_forward.1} parent=0 // pred_check
    _
  $region43: #{stgcn_forward.1} parent=0 // pred_check_branch
    %40 = sbr.rel (0) target = $region45
  $region44: #{stgcn_forward.1} parent=0 // pred_region
    _
  $region45: #{stgcn_forward.1} parent=0 // pred_fallthru
    _
  // Predicated region
  $region46: #{stgcn_forward.1} parent=0 // pred_check
    _
  $region47: #{stgcn_forward.1} parent=0 // pred_check_branch
    %42 = sbr.rel (0) target = $region49
  $region48: #{stgcn_forward.1} parent=0 // pred_region
    _
  $region49: #{stgcn_forward.1} parent=0 // pred_fallthru
    _
  // Predicated region
  $region50: #{stgcn_forward.1} parent=0 // pred_check
    _
  $region51: #{stgcn_forward.1} parent=0 // pred_check_branch
    %44 = sbr.rel (0) target = $region53
  $region52: #{stgcn_forward.1} parent=0 // pred_region
    _
  $region53: #{stgcn_forward.1} parent=0 // pred_fallthru
    _
  // Predicated region
  $region54: #{stgcn_forward.1} parent=0 // pred_check
    _
  $region55: #{stgcn_forward.1} parent=0 // pred_check_branch
    %46 = sbr.rel (0) target = $region57
  $region56: #{stgcn_forward.1} parent=0 // pred_region
    _
  $region57: #{stgcn_forward.1} parent=0 // pred_fallthru
    _
  %v48 = vld [vmem:[%s0] sm:$0xf]
  %v49 = vld [vmem:[%s1] sm:$0xf]
  %v50 = vld [vmem:[%s1 + $0x4] sm:$0xf]
  %v51 = vld [vmem:[%s1 + $0x8] sm:$0xf]
  %v52 = vld [vmem:[%s1 + $0xc] sm:$0xf]
  %v53 = vld [vmem:[%s1 + $0x10] sm:$0xf]
  %v54 = vld [vmem:[%s1 + $0x14] sm:$0xf]
  %v55 = vld [vmem:[%s1 + $0x18] sm:$0xf]
  %v56 = vld [vmem:[%s1 + $0x1c] sm:$0xf]
  %v57 = vld [vmem:[%s1 + $0x20] sm:$0xf]
  %v58 = vld [vmem:[%s1 + $0x24] sm:$0xf]
  %v59 = vld [vmem:[%s1 + $0x28] sm:$0xf]
  %v60 = vld [vmem:[%s1 + $0x2c] sm:$0xf]
  %v61 = vld [vmem:[%s1 + $0x30] sm:$0xf]
  %v62 = vld [vmem:[%s1 + $0x34] sm:$0xf]
  %v63 = vld [vmem:[%s1 + $0x38] sm:$0xf]
  %v64 = vld [vmem:[%s1 + $0x3c] sm:$0xf]
  %v81 = vunpack.c.l.b16 %v49
  %v82 = vunpack.c.l.b16 %v50
  %v83 = vunpack.c.l.b16 %v51
  %v84 = vunpack.c.l.b16 %v52
  %v85 = vunpack.c.l.b16 %v53
  %v86 = vunpack.c.l.b16 %v54
  %v87 = vunpack.c.l.b16 %v55
  %v88 = vunpack.c.l.b16 %v56
  %v89 = vunpack.c.l.b16 %v57
  %v90 = vunpack.c.l.b16 %v58
  %v91 = vunpack.c.l.b16 %v59
  %v92 = vunpack.c.l.b16 %v60
  %v93 = vunpack.c.l.b16 %v61
  %v94 = vunpack.c.l.b16 %v62
  %v95 = vunpack.c.l.b16 %v63
  %v96 = vunpack.c.l.b16 %v64
  %v97 = vpack.c.b16 %v82, %v81
  %v98 = vpack.c.b16 %v84, %v83
  %v99 = vpack.c.b16 %v86, %v85
  %v100 = vpack.c.b16 %v88, %v87
  %v101 = vpack.c.b16 %v90, %v89
  %v102 = vpack.c.b16 %v92, %v91
  %v103 = vpack.c.b16 %v94, %v93
  %v104 = vpack.c.b16 %v96, %v95
  %113 = vmatprep.subr.bf16.mxu0 0
  %114 = vmatpush1.bf16.msra.mxu0 %v97
  %115 = vmatprep.subr.bf16.mxu0 0
  %116 = vmatpush1.bf16.msra.mxu0 %v98
  %117 = vmatprep.subr.bf16.mxu0 0
  %118 = vmatpush1.bf16.msra.mxu0 %v99
  %119 = vmatprep.subr.bf16.mxu0 0
  %120 = vmatpush1.bf16.msra.mxu0 %v100
  %121 = vmatprep.subr.bf16.mxu0 0
  %122 = vmatpush1.bf16.msra.mxu0 %v101
  %123 = vmatprep.subr.bf16.mxu0 0
  %124 = vmatpush1.bf16.msra.mxu0 %v102
  %125 = vmatprep.subr.bf16.mxu0 0
  %126 = vmatpush1.bf16.msra.mxu0 %v103
  %127 = vmatprep.subr.bf16.mxu0 0
  %128 = vmatpush1.bf16.msra.mxu0 %v104
  %129 = vmatprep.subr.bf16.mxu0 0
  %130 = vmatpush1.bf16.msra.mxu0 0
  %131 = vmatprep.subr.bf16.mxu0 0
  %132 = vmatpush1.bf16.msra.mxu0 0
  %133 = vmatprep.subr.bf16.mxu0 0
  %134 = vmatpush1.bf16.msra.mxu0 0
  %135 = vmatprep.subr.bf16.mxu0 0
  %136 = vmatpush1.bf16.msra.mxu0 0
  %137 = vmatprep.subr.bf16.mxu0 0
  %138 = vmatpush1.bf16.msra.mxu0 0
  %139 = vmatprep.subr.bf16.mxu0 0
  %140 = vmatpush1.bf16.msra.mxu0 0
  %141 = vmatprep.subr.bf16.mxu0 0
  %142 = vmatpush1.bf16.msra.mxu0 0
  %143 = vmatprep.subr.bf16.mxu0 0
  %144 = vmatpush1.bf16.msra.mxu0 0
  %145 = vmatprep.mubr.bf16.mxu0 0
  %146 = vmatmul.mubr.bf16.gmra.mrb[0].mxu0 %v48
  %v147 = vpop.f32.mrb[0].mxu0
  %v148 = vadd.f32 0.0, %v147
  %v149 = vpop.f32.mrb[0].mxu0
  %v150 = vpop.f32.mrb[0].mxu0
  %v151 = vpop.f32.mrb[0].mxu0
  %152 = vdwg.mxu0
  %v153 = vld [vmem:[%s2] sm:$0xf]
  %v154 = vld [vmem:[%s2 + $0x4] sm:$0xf]
  %v155 = vld [vmem:[%s2 + $0x8] sm:$0xf]
  %v156 = vld [vmem:[%s2 + $0xc] sm:$0xf]
  %v157 = vld [vmem:[%s2 + $0x10] sm:$0xf]
  %v158 = vld [vmem:[%s2 + $0x14] sm:$0xf]
  %v159 = vld [vmem:[%s2 + $0x18] sm:$0xf]
  %v160 = vld [vmem:[%s2 + $0x1c] sm:$0xf]
  %v161 = vpack.c.bf16 %v148, %v148
  %v162 = vld [vmem:[%s3] sm:$0xff]
  %v163 = vld [vmem:[%s3 + $0x8] sm:$0xff]
  %v164 = vld [vmem:[%s3 + $0x10] sm:$0xff]
  %v165 = vld [vmem:[%s3 + $0x18] sm:$0xff]
  %v166 = vld [vmem:[%s3 + $0x20] sm:$0xff]
  %v167 = vld [vmem:[%s3 + $0x28] sm:$0xff]
  %v168 = vld [vmem:[%s3 + $0x30] sm:$0xff]
  %v169 = vld [vmem:[%s3 + $0x38] sm:$0xff]
  %171 = vset.pattern.permute.xlu0 0
  %172 = vperm.xlu0 %171, %v162
  %v173 = vpop.permute.xlu0 %172
  %176 = vset.pattern.permute.xlu0 0
  %177 = vperm.xlu0 %176, %v163
  %v178 = vpop.permute.xlu0 %177
  %181 = vset.pattern.permute.xlu0 0
  %182 = vperm.xlu0 %181, %v164
  %v183 = vpop.permute.xlu0 %182
  %186 = vset.pattern.permute.xlu0 0
  %187 = vperm.xlu0 %186, %v165
  %v188 = vpop.permute.xlu0 %187
  %191 = vset.pattern.permute.xlu0 0
  %192 = vperm.xlu0 %191, %v166
  %v193 = vpop.permute.xlu0 %192
  %196 = vset.pattern.permute.xlu0 0
  %197 = vperm.xlu0 %196, %v167
  %v198 = vpop.permute.xlu0 %197
  %201 = vset.pattern.permute.xlu0 0
  %202 = vperm.xlu0 %201, %v168
  %v203 = vpop.permute.xlu0 %202
  %206 = vset.pattern.permute.xlu0 0
  %207 = vperm.xlu0 %206, %v169
  %v208 = vpop.permute.xlu0 %207
  %v218 = vunpack.c.l.b16 %v153
  %v219 = vunpack.c.l.b16 %v154
  %v220 = vunpack.c.l.b16 %v155
  %v221 = vunpack.c.l.b16 %v156
  %v222 = vunpack.c.l.b16 %v157
  %v223 = vunpack.c.l.b16 %v158
  %v224 = vunpack.c.l.b16 %v159
  %v225 = vunpack.c.l.b16 %v160
  %v226 = vpack.c.b16 %v219, %v218
  %v227 = vpack.c.b16 %v221, %v220
  %v228 = vpack.c.b16 %v223, %v222
  %v229 = vpack.c.b16 %v225, %v224
  %vm230 = vcmask 64512
  %v232 = vsel %vm230, %v226, 0
  %v235 = vsel %vm230, %v227, 0
  %v238 = vsel %vm230, %v228, 0
  %v241 = vsel %vm230, %v229, 0
  %vm243 = vcmask 1043456
  %v245 = vsel %vm243, %v161, 0
  %247 = vmatprep.subr.bf16.mxu0 0
  %248 = vmatpush1.bf16.msra.mxu0 %v245
  %249 = vmatprep.subr.bf16.mxu0 0
  %250 = vmatpush1.bf16.msra.mxu0 0
  %251 = vmatprep.subr.bf16.mxu0 0
  %252 = vmatpush1.bf16.msra.mxu0 0
  %253 = vmatprep.subr.bf16.mxu0 0
  %254 = vmatpush1.bf16.msra.mxu0 0
  %255 = vmatprep.subr.bf16.mxu0 0
  %256 = vmatpush1.bf16.msra.mxu0 0
  %257 = vmatprep.subr.bf16.mxu0 0
  %258 = vmatpush1.bf16.msra.mxu0 0
  %259 = vmatprep.subr.bf16.mxu0 0
  %260 = vmatpush1.bf16.msra.mxu0 0
  %261 = vmatprep.subr.bf16.mxu0 0
  %262 = vmatpush1.bf16.msra.mxu0 0
  %263 = vmatprep.subr.bf16.mxu0 0
  %264 = vmatpush1.bf16.msra.mxu0 0
  %265 = vmatprep.subr.bf16.mxu0 0
  %266 = vmatpush1.bf16.msra.mxu0 0
  %267 = vmatprep.subr.bf16.mxu0 0
  %268 = vmatpush1.bf16.msra.mxu0 0
  %269 = vmatprep.subr.bf16.mxu0 0
  %270 = vmatpush1.bf16.msra.mxu0 0
  %271 = vmatprep.subr.bf16.mxu0 0
  %272 = vmatpush1.bf16.msra.mxu0 0
  %273 = vmatprep.subr.bf16.mxu0 0
  %274 = vmatpush1.bf16.msra.mxu0 0
  %275 = vmatprep.subr.bf16.mxu0 0
  %276 = vmatpush1.bf16.msra.mxu0 0
  %277 = vmatprep.subr.bf16.mxu0 0
  %278 = vmatpush1.bf16.msra.mxu0 0
  %279 = vmatprep.mubr.bf16.mxu0 0
  %280 = vmatmul.mubr.bf16.gmra.mrb[0].mxu0 %v232
  %v281 = vpop.f32.mrb[0].mxu0
  %v282 = vadd.f32 %v173, %v281
  %v283 = vpop.f32.mrb[0].mxu0
  %v284 = vpop.f32.mrb[0].mxu0
  %v285 = vadd.f32 %v178, %v284
  %v286 = vpop.f32.mrb[0].mxu0
  %287 = vmatprep.mubr.bf16.mxu0 0
  %288 = vmatmul.mubr.bf16.gmra.mrb[0].mxu0 %v235
  %v289 = vpop.f32.mrb[0].mxu0
  %v290 = vadd.f32 %v183, %v289
  %v291 = vpop.f32.mrb[0].mxu0
  %v292 = vpop.f32.mrb[0].mxu0
  %v293 = vadd.f32 %v188, %v292
  %v294 = vpop.f32.mrb[0].mxu0
  %295 = vmatprep.mubr.bf16.mxu0 0
  %296 = vmatmul.mubr.bf16.gmra.mrb[0].mxu0 %v238
  %v297 = vpop.f32.mrb[0].mxu0
  %v298 = vadd.f32 %v193, %v297
  %v299 = vpop.f32.mrb[0].mxu0
  %v300 = vpop.f32.mrb[0].mxu0
  %v301 = vadd.f32 %v198, %v300
  %v302 = vpop.f32.mrb[0].mxu0
  %303 = vmatprep.mubr.bf16.mxu0 0
  %304 = vmatmul.mubr.bf16.gmra.mrb[0].mxu0 %v241
  %v305 = vpop.f32.mrb[0].mxu0
  %v306 = vadd.f32 %v203, %v305
  %v307 = vpop.f32.mrb[0].mxu0
  %v308 = vpop.f32.mrb[0].mxu0
  %v309 = vadd.f32 %v208, %v308
  %v310 = vpop.f32.mrb[0].mxu0
  %311 = vdwg.mxu0
  %v312 = vmax.f32 %v282, 0.0
  %v313 = vmax.f32 %v285, 0.0
  %v314 = vmax.f32 %v290, 0.0
  %v315 = vmax.f32 %v293, 0.0
  %v316 = vmax.f32 %v298, 0.0
  %v317 = vmax.f32 %v301, 0.0
  %v318 = vmax.f32 %v306, 0.0
  %v319 = vmax.f32 %v309, 0.0
  %v320 = vld [vmem:[%s4] sm:$0xf]
  %v321 = vld [vmem:[%s4 + $0x4] sm:$0xf]
  %v322 = vld [vmem:[%s4 + $0x8] sm:$0xf]
  %v323 = vld [vmem:[%s4 + $0xc] sm:$0xf]
  %v324 = vld [vmem:[%s4 + $0x10] sm:$0xf]
  %v325 = vld [vmem:[%s4 + $0x14] sm:$0xf]
  %v326 = vld [vmem:[%s4 + $0x18] sm:$0xf]
  %v327 = vld [vmem:[%s4 + $0x1c] sm:$0xf]
  %v328 = vpack.c.bf16 %v313, %v312
  %v329 = vpack.c.bf16 %v315, %v314
  %v330 = vpack.c.bf16 %v317, %v316
  %v331 = vpack.c.bf16 %v319, %v318
  %v332 = vld [vmem:[%s5] sm:$0xff]
  %v333 = vld [vmem:[%s5 + $0x8] sm:$0xff]
  %v334 = vld [vmem:[%s5 + $0x10] sm:$0xff]
  %v335 = vld [vmem:[%s5 + $0x18] sm:$0xff]
  %v336 = vld [vmem:[%s5 + $0x20] sm:$0xff]
  %v337 = vld [vmem:[%s5 + $0x28] sm:$0xff]
  %v338 = vld [vmem:[%s5 + $0x30] sm:$0xff]
  %v339 = vld [vmem:[%s5 + $0x38] sm:$0xff]
  %341 = vset.pattern.permute.xlu0 0
  %342 = vperm.xlu0 %341, %v332
  %v343 = vpop.permute.xlu0 %342
  %346 = vset.pattern.permute.xlu0 0
  %347 = vperm.xlu0 %346, %v333
  %v348 = vpop.permute.xlu0 %347
  %351 = vset.pattern.permute.xlu0 0
  %352 = vperm.xlu0 %351, %v334
  %v353 = vpop.permute.xlu0 %352
  %356 = vset.pattern.permute.xlu0 0
  %357 = vperm.xlu0 %356, %v335
  %v358 = vpop.permute.xlu0 %357
  %361 = vset.pattern.permute.xlu0 0
  %362 = vperm.xlu0 %361, %v336
  %v363 = vpop.permute.xlu0 %362
  %366 = vset.pattern.permute.xlu0 0
  %367 = vperm.xlu0 %366, %v337
  %v368 = vpop.permute.xlu0 %367
  %371 = vset.pattern.permute.xlu0 0
  %372 = vperm.xlu0 %371, %v338
  %v373 = vpop.permute.xlu0 %372
  %376 = vset.pattern.permute.xlu0 0
  %377 = vperm.xlu0 %376, %v339
  %v378 = vpop.permute.xlu0 %377
  %v388 = vunpack.c.l.b16 %v320
  %v389 = vunpack.c.l.b16 %v321
  %v390 = vunpack.c.l.b16 %v322
  %v391 = vunpack.c.l.b16 %v323
  %v392 = vunpack.c.l.b16 %v324
  %v393 = vunpack.c.l.b16 %v325
  %v394 = vunpack.c.l.b16 %v326
  %v395 = vunpack.c.l.b16 %v327
  %v396 = vpack.c.b16 %v389, %v388
  %v397 = vpack.c.b16 %v391, %v390
  %v398 = vpack.c.b16 %v393, %v392
  %v399 = vpack.c.b16 %v395, %v394
  %vm400 = vcmask 523264
  %v402 = vsel %vm400, %v396, 0
  %v405 = vsel %vm400, %v397, 0
  %v408 = vsel %vm400, %v398, 0
  %v411 = vsel %vm400, %v399, 0
  %413 = vmatprep.subr.bf16.mxu0 0
  %414 = vmatpush1.bf16.msra.mxu0 %v328
  %415 = vmatprep.subr.bf16.mxu0 0
  %416 = vmatpush1.bf16.msra.mxu0 %v329
  %417 = vmatprep.subr.bf16.mxu0 0
  %418 = vmatpush1.bf16.msra.mxu0 %v330
  %419 = vmatprep.subr.bf16.mxu0 0
  %420 = vmatpush1.bf16.msra.mxu0 %v331
  %421 = vmatprep.subr.bf16.mxu0 0
  %422 = vmatpush1.bf16.msra.mxu0 0
  %423 = vmatprep.subr.bf16.mxu0 0
  %424 = vmatpush1.bf16.msra.mxu0 0
  %425 = vmatprep.subr.bf16.mxu0 0
  %426 = vmatpush1.bf16.msra.mxu0 0
  %427 = vmatprep.subr.bf16.mxu0 0
  %428 = vmatpush1.bf16.msra.mxu0 0
  %429 = vmatprep.subr.bf16.mxu0 0
  %430 = vmatpush1.bf16.msra.mxu0 0
  %431 = vmatprep.subr.bf16.mxu0 0
  %432 = vmatpush1.bf16.msra.mxu0 0
  %433 = vmatprep.subr.bf16.mxu0 0
  %434 = vmatpush1.bf16.msra.mxu0 0
  %435 = vmatprep.subr.bf16.mxu0 0
  %436 = vmatpush1.bf16.msra.mxu0 0
  %437 = vmatprep.subr.bf16.mxu0 0
  %438 = vmatpush1.bf16.msra.mxu0 0
  %439 = vmatprep.subr.bf16.mxu0 0
  %440 = vmatpush1.bf16.msra.mxu0 0
  %441 = vmatprep.subr.bf16.mxu0 0
  %442 = vmatpush1.bf16.msra.mxu0 0
  %443 = vmatprep.subr.bf16.mxu0 0
  %444 = vmatpush1.bf16.msra.mxu0 0
  %445 = vmatprep.mubr.bf16.mxu0 0
  %446 = vmatmul.mubr.bf16.gmra.mrb[0].mxu0 %v402
  %v447 = vpop.f32.mrb[0].mxu0
  %v448 = vadd.f32 %v343, %v447
  %v449 = vpop.f32.mrb[0].mxu0
  %v450 = vpop.f32.mrb[0].mxu0
  %v451 = vadd.f32 %v348, %v450
  %v452 = vpop.f32.mrb[0].mxu0
  %453 = vmatprep.mubr.bf16.mxu0 0
  %454 = vmatmul.mubr.bf16.gmra.mrb[0].mxu0 %v405
  %v455 = vpop.f32.mrb[0].mxu0
  %v456 = vadd.f32 %v353, %v455
  %v457 = vpop.f32.mrb[0].mxu0
  %v458 = vpop.f32.mrb[0].mxu0
  %v459 = vadd.f32 %v358, %v458
  %v460 = vpop.f32.mrb[0].mxu0
  %461 = vmatprep.mubr.bf16.mxu0 0
  %462 = vmatmul.mubr.bf16.gmra.mrb[0].mxu0 %v408
  %v463 = vpop.f32.mrb[0].mxu0
  %v464 = vadd.f32 %v363, %v463
  %v465 = vpop.f32.mrb[0].mxu0
  %v466 = vpop.f32.mrb[0].mxu0
  %v467 = vadd.f32 %v368, %v466
  %v468 = vpop.f32.mrb[0].mxu0
  %469 = vmatprep.mubr.bf16.mxu0 0
  %470 = vmatmul.mubr.bf16.gmra.mrb[0].mxu0 %v411
  %v471 = vpop.f32.mrb[0].mxu0
  %v472 = vadd.f32 %v373, %v471
  %v473 = vpop.f32.mrb[0].mxu0
  %v474 = vpop.f32.mrb[0].mxu0
  %v475 = vadd.f32 %v378, %v474
  %v476 = vpop.f32.mrb[0].mxu0
  %477 = vdwg.mxu0
  %v478 = vmax.f32 %v448, 0.0
  %v479 = vmax.f32 %v451, 0.0
  %v480 = vmax.f32 %v456, 0.0
  %v481 = vmax.f32 %v459, 0.0
  %v482 = vmax.f32 %v464, 0.0
  %v483 = vmax.f32 %v467, 0.0
  %v484 = vmax.f32 %v472, 0.0
  %v485 = vmax.f32 %v475, 0.0
  %v486 = vld [vmem:[%s6] sm:$0xff]
  %v487 = vld [vmem:[%s6 + $0x8] sm:$0xff]
  %v488 = vld [vmem:[%s6 + $0x10] sm:$0xff]
  %v489 = vld [vmem:[%s6 + $0x18] sm:$0xff]
  %v490 = vld [vmem:[%s6 + $0x20] sm:$0xff]
  %v491 = vld [vmem:[%s6 + $0x28] sm:$0xff]
  %v492 = vld [vmem:[%s6 + $0x30] sm:$0xff]
  %v493 = vld [vmem:[%s6 + $0x38] sm:$0xff]
  %495 = vset.pattern.permute.xlu0 0
  %496 = vperm.xlu0 %495, %v486
  %v497 = vpop.permute.xlu0 %496
  %500 = vset.pattern.permute.xlu0 0
  %501 = vperm.xlu0 %500, %v487
  %v502 = vpop.permute.xlu0 %501
  %505 = vset.pattern.permute.xlu0 0
  %506 = vperm.xlu0 %505, %v488
  %v507 = vpop.permute.xlu0 %506
  %510 = vset.pattern.permute.xlu0 0
  %511 = vperm.xlu0 %510, %v489
  %v512 = vpop.permute.xlu0 %511
  %515 = vset.pattern.permute.xlu0 0
  %516 = vperm.xlu0 %515, %v490
  %v517 = vpop.permute.xlu0 %516
  %520 = vset.pattern.permute.xlu0 0
  %521 = vperm.xlu0 %520, %v491
  %v522 = vpop.permute.xlu0 %521
  %525 = vset.pattern.permute.xlu0 0
  %526 = vperm.xlu0 %525, %v492
  %v527 = vpop.permute.xlu0 %526
  %530 = vset.pattern.permute.xlu0 0
  %531 = vperm.xlu0 %530, %v493
  %v532 = vpop.permute.xlu0 %531
  %v534 = vmul.f32 %v478, %v497
  %v535 = vmul.f32 %v479, %v502
  %v536 = vmul.f32 %v480, %v507
  %v537 = vmul.f32 %v481, %v512
  %v538 = vmul.f32 %v482, %v517
  %v539 = vmul.f32 %v483, %v522
  %v540 = vmul.f32 %v484, %v527
  %v541 = vmul.f32 %v485, %v532
  %v542 = vld [vmem:[%s7] sm:$0xff]
  %v543 = vld [vmem:[%s7 + $0x8] sm:$0xff]
  %v544 = vld [vmem:[%s7 + $0x10] sm:$0xff]
  %v545 = vld [vmem:[%s7 + $0x18] sm:$0xff]
  %v546 = vld [vmem:[%s7 + $0x20] sm:$0xff]
  %v547 = vld [vmem:[%s7 + $0x28] sm:$0xff]
  %v548 = vld [vmem:[%s7 + $0x30] sm:$0xff]
  %v549 = vld [vmem:[%s7 + $0x38] sm:$0xff]
  %551 = vset.pattern.permute.xlu0 0
  %552 = vperm.xlu0 %551, %v542
  %v553 = vpop.permute.xlu0 %552
  %556 = vset.pattern.permute.xlu0 0
  %557 = vperm.xlu0 %556, %v543
  %v558 = vpop.permute.xlu0 %557
  %561 = vset.pattern.permute.xlu0 0
  %562 = vperm.xlu0 %561, %v544
  %v563 = vpop.permute.xlu0 %562
  %566 = vset.pattern.permute.xlu0 0
  %567 = vperm.xlu0 %566, %v545
  %v568 = vpop.permute.xlu0 %567
  %571 = vset.pattern.permute.xlu0 0
  %572 = vperm.xlu0 %571, %v546
  %v573 = vpop.permute.xlu0 %572
  %576 = vset.pattern.permute.xlu0 0
  %577 = vperm.xlu0 %576, %v547
  %v578 = vpop.permute.xlu0 %577
  %581 = vset.pattern.permute.xlu0 0
  %582 = vperm.xlu0 %581, %v548
  %v583 = vpop.permute.xlu0 %582
  %586 = vset.pattern.permute.xlu0 0
  %587 = vperm.xlu0 %586, %v549
  %v588 = vpop.permute.xlu0 %587
  %v590 = vadd.f32 %v534, %v553
  %v591 = vadd.f32 %v535, %v558
  %v592 = vadd.f32 %v536, %v563
  %v593 = vadd.f32 %v537, %v568
  %v594 = vadd.f32 %v538, %v573
  %v595 = vadd.f32 %v539, %v578
  %v596 = vadd.f32 %v540, %v583
  %v597 = vadd.f32 %v541, %v588
  %v598 = vlaneseq
  %v599 = vand.u32 %v598, 127
  %vm600 = vcmp.ge.s32.totalorder %v599, 16
  %vm601 = vcmp.lt.s32.totalorder %v599, 112
  %610 = vrot.lane.b32.xlu0 %v590, 16
  %v611 = vpop.permute.xlu0 %610
  %612 = vrot.lane.b32.xlu0 %v591, 16
  %v613 = vpop.permute.xlu0 %612
  %614 = vrot.lane.b32.xlu0 %v592, 16
  %v615 = vpop.permute.xlu0 %614
  %616 = vrot.lane.b32.xlu0 %v593, 16
  %v617 = vpop.permute.xlu0 %616
  %618 = vrot.lane.b32.xlu0 %v594, 16
  %v619 = vpop.permute.xlu0 %618
  %620 = vrot.lane.b32.xlu0 %v595, 16
  %v621 = vpop.permute.xlu0 %620
  %622 = vrot.lane.b32.xlu0 %v596, 16
  %v623 = vpop.permute.xlu0 %622
  %624 = vrot.lane.b32.xlu0 %v597, 16
  %v625 = vpop.permute.xlu0 %624
  %v634 = vsel %vm600, %v611, 0.0
  %v635 = vsel %vm600, %v613, 0.0
  %v636 = vsel %vm600, %v615, 0.0
  %v637 = vsel %vm600, %v617, 0.0
  %v638 = vsel %vm600, %v619, 0.0
  %v639 = vsel %vm600, %v621, 0.0
  %v640 = vsel %vm600, %v623, 0.0
  %v641 = vsel %vm600, %v625, 0.0
  %642 = vrot.lane.b32.xlu0 %v590, 112
  %v643 = vpop.permute.xlu0 %642
  %644 = vrot.lane.b32.xlu0 %v591, 112
  %v645 = vpop.permute.xlu0 %644
  %646 = vrot.lane.b32.xlu0 %v592, 112
  %v647 = vpop.permute.xlu0 %646
  %648 = vrot.lane.b32.xlu0 %v593, 112
  %v649 = vpop.permute.xlu0 %648
  %650 = vrot.lane.b32.xlu0 %v594, 112
  %v651 = vpop.permute.xlu0 %650
  %652 = vrot.lane.b32.xlu0 %v595, 112
  %v653 = vpop.permute.xlu0 %652
  %654 = vrot.lane.b32.xlu0 %v596, 112
  %v655 = vpop.permute.xlu0 %654
  %656 = vrot.lane.b32.xlu0 %v597, 112
  %v657 = vpop.permute.xlu0 %656
  %v666 = vsel %vm601, %v643, 0.0
  %v667 = vsel %vm601, %v645, 0.0
  %v668 = vsel %vm601, %v647, 0.0
  %v669 = vsel %vm601, %v649, 0.0
  %v670 = vsel %vm601, %v651, 0.0
  %v671 = vsel %vm601, %v653, 0.0
  %v672 = vsel %vm601, %v655, 0.0
  %v673 = vsel %vm601, %v657, 0.0
  %v674 = vpack.c.bf16 %v635, %v634
  %v675 = vpack.c.bf16 %v637, %v636
  %v676 = vpack.c.bf16 %v639, %v638
  %v677 = vpack.c.bf16 %v641, %v640
  %v678 = vpack.c.bf16 %v591, %v590
  %v679 = vpack.c.bf16 %v593, %v592
  %v680 = vpack.c.bf16 %v595, %v594
  %v681 = vpack.c.bf16 %v597, %v596
  %v682 = vpack.c.bf16 %v667, %v666
  %v683 = vpack.c.bf16 %v669, %v668
  %v684 = vpack.c.bf16 %v671, %v670
  %v685 = vpack.c.bf16 %v673, %v672
  %v686 = vld [vmem:[%s8] sm:$0xff]
  %v687 = vld [vmem:[%s8 + $0x8] sm:$0xff]
  %v688 = vld [vmem:[%s8 + $0x10] sm:$0xff]
  %v689 = vld [vmem:[%s8 + $0x18] sm:$0xff]
  %v690 = vld [vmem:[%s8 + $0x20] sm:$0xff]
  %v691 = vld [vmem:[%s8 + $0x28] sm:$0xff]
  %v692 = vld [vmem:[%s8 + $0x30] sm:$0xff]
  %v693 = vld [vmem:[%s8 + $0x38] sm:$0xff]
  %v694 = vld [vmem:[%s9] sm:$0xff]
  %v695 = vld [vmem:[%s9 + $0x8] sm:$0xff]
  %v696 = vld [vmem:[%s9 + $0x10] sm:$0xff]
  %v697 = vld [vmem:[%s9 + $0x18] sm:$0xff]
  %v698 = vld [vmem:[%s9 + $0x20] sm:$0xff]
  %v699 = vld [vmem:[%s9 + $0x28] sm:$0xff]
  %v700 = vld [vmem:[%s9 + $0x30] sm:$0xff]
  %v701 = vld [vmem:[%s9 + $0x38] sm:$0xff]
  %703 = vset.pattern.permute.xlu0 0
  %704 = vperm.xlu0 %703, %v694
  %v705 = vpop.permute.xlu0 %704
  %708 = vset.pattern.permute.xlu0 0
  %709 = vperm.xlu0 %708, %v695
  %v710 = vpop.permute.xlu0 %709
  %713 = vset.pattern.permute.xlu0 0
  %714 = vperm.xlu0 %713, %v696
  %v715 = vpop.permute.xlu0 %714
  %718 = vset.pattern.permute.xlu0 0
  %719 = vperm.xlu0 %718, %v697
  %v720 = vpop.permute.xlu0 %719
  %723 = vset.pattern.permute.xlu0 0
  %724 = vperm.xlu0 %723, %v698
  %v725 = vpop.permute.xlu0 %724
  %728 = vset.pattern.permute.xlu0 0
  %729 = vperm.xlu0 %728, %v699
  %v730 = vpop.permute.xlu0 %729
  %733 = vset.pattern.permute.xlu0 0
  %734 = vperm.xlu0 %733, %v700
  %v735 = vpop.permute.xlu0 %734
  %738 = vset.pattern.permute.xlu0 0
  %739 = vperm.xlu0 %738, %v701
  %v740 = vpop.permute.xlu0 %739
  %v750 = vunpack.c.l.b16 %v686
  %v751 = vunpack.c.h.b16 %v686
  %v752 = vunpack.c.l.b16 %v687
  %v753 = vunpack.c.h.b16 %v687
  %v754 = vunpack.c.l.b16 %v688
  %v755 = vunpack.c.h.b16 %v688
  %v756 = vunpack.c.l.b16 %v689
  %v757 = vunpack.c.h.b16 %v689
  %v758 = vunpack.c.l.b16 %v690
  %v759 = vunpack.c.h.b16 %v690
  %v760 = vunpack.c.l.b16 %v691
  %v761 = vunpack.c.h.b16 %v691
  %v762 = vunpack.c.l.b16 %v692
  %v763 = vunpack.c.h.b16 %v692
  %v764 = vunpack.c.l.b16 %v693
  %v765 = vunpack.c.h.b16 %v693
  %v766 = vpack.c.b16 %v752, %v750
  %v767 = vpack.c.b16 %v753, %v751
  %v768 = vpack.c.b16 %v756, %v754
  %v769 = vpack.c.b16 %v757, %v755
  %v770 = vpack.c.b16 %v760, %v758
  %v771 = vpack.c.b16 %v761, %v759
  %v772 = vpack.c.b16 %v764, %v762
  %v773 = vpack.c.b16 %v765, %v763
  %v779 = vsel %vm400, %v767, 0
  %v782 = vsel %vm400, %v769, 0
  %v785 = vsel %vm400, %v771, 0
  %v788 = vsel %vm400, %v773, 0
  %790 = vmatprep.subr.bf16.mxu0 0
  %791 = vmatpush1.bf16.msra.mxu0 %v674
  %792 = vmatprep.subr.bf16.mxu0 0
  %793 = vmatpush1.bf16.msra.mxu0 %v675
  %794 = vmatprep.subr.bf16.mxu0 0
  %795 = vmatpush1.bf16.msra.mxu0 %v676
  %796 = vmatprep.subr.bf16.mxu0 0
  %797 = vmatpush1.bf16.msra.mxu0 %v677
  %798 = vmatprep.subr.bf16.mxu0 0
  %799 = vmatpush1.bf16.msra.mxu0 %v678
  %800 = vmatprep.subr.bf16.mxu0 0
  %801 = vmatpush1.bf16.msra.mxu0 %v679
  %802 = vmatprep.subr.bf16.mxu0 0
  %803 = vmatpush1.bf16.msra.mxu0 %v680
  %804 = vmatprep.subr.bf16.mxu0 0
  %805 = vmatpush1.bf16.msra.mxu0 %v681
  %806 = vmatprep.subr.bf16.mxu0 0
  %807 = vmatpush1.bf16.msra.mxu0 %v682
  %808 = vmatprep.subr.bf16.mxu0 0
  %809 = vmatpush1.bf16.msra.mxu0 %v683
  %810 = vmatprep.subr.bf16.mxu0 0
  %811 = vmatpush1.bf16.msra.mxu0 %v684
  %812 = vmatprep.subr.bf16.mxu0 0
  %813 = vmatpush1.bf16.msra.mxu0 %v685
  %814 = vmatprep.subr.bf16.mxu0 0
  %815 = vmatpush1.bf16.msra.mxu0 0
  %816 = vmatprep.subr.bf16.mxu0 0
  %817 = vmatpush1.bf16.msra.mxu0 0
  %818 = vmatprep.subr.bf16.mxu0 0
  %819 = vmatpush1.bf16.msra.mxu0 0
  %820 = vmatprep.subr.bf16.mxu0 0
  %821 = vmatpush1.bf16.msra.mxu0 0
  %822 = vmatprep.mubr.bf16.mxu0 %v779
  %823 = vmatmul.mubr.bf16.gmra.mrb[0].mxu0 %v766
  %v824 = vpop.f32.mrb[0].mxu0
  %v825 = vadd.f32 %v705, %v824
  %v826 = vpop.f32.mrb[0].mxu0
  %v827 = vpop.f32.mrb[0].mxu0
  %v828 = vadd.f32 %v710, %v827
  %v829 = vpop.f32.mrb[0].mxu0
  %830 = vmatprep.mubr.bf16.mxu0 %v782
  %831 = vmatmul.mubr.bf16.gmra.mrb[0].mxu0 %v768
  %v832 = vpop.f32.mrb[0].mxu0
  %v833 = vadd.f32 %v715, %v832
  %v834 = vpop.f32.mrb[0].mxu0
  %v835 = vpop.f32.mrb[0].mxu0
  %v836 = vadd.f32 %v720, %v835
  %v837 = vpop.f32.mrb[0].mxu0
  %838 = vmatprep.mubr.bf16.mxu0 %v785
  %839 = vmatmul.mubr.bf16.gmra.mrb[0].mxu0 %v770
  %v840 = vpop.f32.mrb[0].mxu0
  %v841 = vadd.f32 %v725, %v840
  %v842 = vpop.f32.mrb[0].mxu0
  %v843 = vpop.f32.mrb[0].mxu0
  %v844 = vadd.f32 %v730, %v843
  %v845 = vpop.f32.mrb[0].mxu0
  %846 = vmatprep.mubr.bf16.mxu0 %v788
  %847 = vmatmul.mubr.bf16.gmra.mrb[0].mxu0 %v772
  %v848 = vpop.f32.mrb[0].mxu0
  %v849 = vadd.f32 %v735, %v848
  %v850 = vpop.f32.mrb[0].mxu0
  %v851 = vpop.f32.mrb[0].mxu0
  %v852 = vadd.f32 %v740, %v851
  %v853 = vpop.f32.mrb[0].mxu0
  %854 = vdwg.mxu0
  %863 = vrot.lane.b32.xlu0 %v825, 16
  %v864 = vpop.permute.xlu0 %863
  %865 = vrot.lane.b32.xlu0 %v828, 16
  %v866 = vpop.permute.xlu0 %865
  %867 = vrot.lane.b32.xlu0 %v833, 16
  %v868 = vpop.permute.xlu0 %867
  %869 = vrot.lane.b32.xlu0 %v836, 16
  %v870 = vpop.permute.xlu0 %869
  %871 = vrot.lane.b32.xlu0 %v841, 16
  %v872 = vpop.permute.xlu0 %871
  %873 = vrot.lane.b32.xlu0 %v844, 16
  %v874 = vpop.permute.xlu0 %873
  %875 = vrot.lane.b32.xlu0 %v849, 16
  %v876 = vpop.permute.xlu0 %875
  %877 = vrot.lane.b32.xlu0 %v852, 16
  %v878 = vpop.permute.xlu0 %877
  %v887 = vsel %vm600, %v864, 0.0
  %v888 = vsel %vm600, %v866, 0.0
  %v889 = vsel %vm600, %v868, 0.0
  %v890 = vsel %vm600, %v870, 0.0
  %v891 = vsel %vm600, %v872, 0.0
  %v892 = vsel %vm600, %v874, 0.0
  %v893 = vsel %vm600, %v876, 0.0
  %v894 = vsel %vm600, %v878, 0.0
  %895 = vrot.lane.b32.xlu0 %v825, 112
  %v896 = vpop.permute.xlu0 %895
  %897 = vrot.lane.b32.xlu0 %v828, 112
  %v898 = vpop.permute.xlu0 %897
  %899 = vrot.lane.b32.xlu0 %v833, 112
  %v900 = vpop.permute.xlu0 %899
  %901 = vrot.lane.b32.xlu0 %v836, 112
  %v902 = vpop.permute.xlu0 %901
  %903 = vrot.lane.b32.xlu0 %v841, 112
  %v904 = vpop.permute.xlu0 %903
  %905 = vrot.lane.b32.xlu0 %v844, 112
  %v906 = vpop.permute.xlu0 %905
  %907 = vrot.lane.b32.xlu0 %v849, 112
  %v908 = vpop.permute.xlu0 %907
  %909 = vrot.lane.b32.xlu0 %v852, 112
  %v910 = vpop.permute.xlu0 %909
  %v919 = vsel %vm601, %v896, 0.0
  %v920 = vsel %vm601, %v898, 0.0
  %v921 = vsel %vm601, %v900, 0.0
  %v922 = vsel %vm601, %v902, 0.0
  %v923 = vsel %vm601, %v904, 0.0
  %v924 = vsel %vm601, %v906, 0.0
  %v925 = vsel %vm601, %v908, 0.0
  %v926 = vsel %vm601, %v910, 0.0
  %v927 = vpack.c.bf16 %v888, %v887
  %v928 = vpack.c.bf16 %v890, %v889
  %v929 = vpack.c.bf16 %v892, %v891
  %v930 = vpack.c.bf16 %v894, %v893
  %v931 = vpack.c.bf16 %v828, %v825
  %v932 = vpack.c.bf16 %v836, %v833
  %v933 = vpack.c.bf16 %v844, %v841
  %v934 = vpack.c.bf16 %v852, %v849
  %v935 = vpack.c.bf16 %v920, %v919
  %v936 = vpack.c.bf16 %v922, %v921
  %v937 = vpack.c.bf16 %v924, %v923
  %v938 = vpack.c.bf16 %v926, %v925
  %v939 = vld [vmem:[%s10] sm:$0xff]
  %v940 = vld [vmem:[%s10 + $0x8] sm:$0xff]
  %v941 = vld [vmem:[%s10 + $0x10] sm:$0xff]
  %v942 = vld [vmem:[%s10 + $0x18] sm:$0xff]
  %v943 = vld [vmem:[%s10 + $0x20] sm:$0xff]
  %v944 = vld [vmem:[%s10 + $0x28] sm:$0xff]
  %v945 = vld [vmem:[%s10 + $0x30] sm:$0xff]
  %v946 = vld [vmem:[%s10 + $0x38] sm:$0xff]
  %v947 = vld [vmem:[%s11] sm:$0xff]
  %v948 = vld [vmem:[%s11 + $0x8] sm:$0xff]
  %v949 = vld [vmem:[%s11 + $0x10] sm:$0xff]
  %v950 = vld [vmem:[%s11 + $0x18] sm:$0xff]
  %v951 = vld [vmem:[%s11 + $0x20] sm:$0xff]
  %v952 = vld [vmem:[%s11 + $0x28] sm:$0xff]
  %v953 = vld [vmem:[%s11 + $0x30] sm:$0xff]
  %v954 = vld [vmem:[%s11 + $0x38] sm:$0xff]
  %956 = vset.pattern.permute.xlu0 0
  %957 = vperm.xlu0 %956, %v947
  %v958 = vpop.permute.xlu0 %957
  %961 = vset.pattern.permute.xlu0 0
  %962 = vperm.xlu0 %961, %v948
  %v963 = vpop.permute.xlu0 %962
  %966 = vset.pattern.permute.xlu0 0
  %967 = vperm.xlu0 %966, %v949
  %v968 = vpop.permute.xlu0 %967
  %971 = vset.pattern.permute.xlu0 0
  %972 = vperm.xlu0 %971, %v950
  %v973 = vpop.permute.xlu0 %972
  %976 = vset.pattern.permute.xlu0 0
  %977 = vperm.xlu0 %976, %v951
  %v978 = vpop.permute.xlu0 %977
  %981 = vset.pattern.permute.xlu0 0
  %982 = vperm.xlu0 %981, %v952
  %v983 = vpop.permute.xlu0 %982
  %986 = vset.pattern.permute.xlu0 0
  %987 = vperm.xlu0 %986, %v953
  %v988 = vpop.permute.xlu0 %987
  %991 = vset.pattern.permute.xlu0 0
  %992 = vperm.xlu0 %991, %v954
  %v993 = vpop.permute.xlu0 %992
  %v1003 = vunpack.c.l.b16 %v939
  %v1004 = vunpack.c.h.b16 %v939
  %v1005 = vunpack.c.l.b16 %v940
  %v1006 = vunpack.c.h.b16 %v940
  %v1007 = vunpack.c.l.b16 %v941
  %v1008 = vunpack.c.h.b16 %v941
  %v1009 = vunpack.c.l.b16 %v942
  %v1010 = vunpack.c.h.b16 %v942
  %v1011 = vunpack.c.l.b16 %v943
  %v1012 = vunpack.c.h.b16 %v943
  %v1013 = vunpack.c.l.b16 %v944
  %v1014 = vunpack.c.h.b16 %v944
  %v1015 = vunpack.c.l.b16 %v945
  %v1016 = vunpack.c.h.b16 %v945
  %v1017 = vunpack.c.l.b16 %v946
  %v1018 = vunpack.c.h.b16 %v946
  %v1019 = vpack.c.b16 %v1005, %v1003
  %v1020 = vpack.c.b16 %v1006, %v1004
  %v1021 = vpack.c.b16 %v1009, %v1007
  %v1022 = vpack.c.b16 %v1010, %v1008
  %v1023 = vpack.c.b16 %v1013, %v1011
  %v1024 = vpack.c.b16 %v1014, %v1012
  %v1025 = vpack.c.b16 %v1017, %v1015
  %v1026 = vpack.c.b16 %v1018, %v1016
  %v1032 = vsel %vm400, %v1020, 0
  %v1035 = vsel %vm400, %v1022, 0
  %v1038 = vsel %vm400, %v1024, 0
  %v1041 = vsel %vm400, %v1026, 0
  %1043 = vmatprep.subr.bf16.mxu0 0
  %1044 = vmatpush1.bf16.msra.mxu0 %v927
  %1045 = vmatprep.subr.bf16.mxu0 0
  %1046 = vmatpush1.bf16.msra.mxu0 %v928
  %1047 = vmatprep.subr.bf16.mxu0 0
  %1048 = vmatpush1.bf16.msra.mxu0 %v929
  %1049 = vmatprep.subr.bf16.mxu0 0
  %1050 = vmatpush1.bf16.msra.mxu0 %v930
  %1051 = vmatprep.subr.bf16.mxu0 0
  %1052 = vmatpush1.bf16.msra.mxu0 %v931
  %1053 = vmatprep.subr.bf16.mxu0 0
  %1054 = vmatpush1.bf16.msra.mxu0 %v932
  %1055 = vmatprep.subr.bf16.mxu0 0
  %1056 = vmatpush1.bf16.msra.mxu0 %v933
  %1057 = vmatprep.subr.bf16.mxu0 0
  %1058 = vmatpush1.bf16.msra.mxu0 %v934
  %1059 = vmatprep.subr.bf16.mxu0 0
  %1060 = vmatpush1.bf16.msra.mxu0 %v935
  %1061 = vmatprep.subr.bf16.mxu0 0
  %1062 = vmatpush1.bf16.msra.mxu0 %v936
  %1063 = vmatprep.subr.bf16.mxu0 0
  %1064 = vmatpush1.bf16.msra.mxu0 %v937
  %1065 = vmatprep.subr.bf16.mxu0 0
  %1066 = vmatpush1.bf16.msra.mxu0 %v938
  %1067 = vmatprep.subr.bf16.mxu0 0
  %1068 = vmatpush1.bf16.msra.mxu0 0
  %1069 = vmatprep.subr.bf16.mxu0 0
  %1070 = vmatpush1.bf16.msra.mxu0 0
  %1071 = vmatprep.subr.bf16.mxu0 0
  %1072 = vmatpush1.bf16.msra.mxu0 0
  %1073 = vmatprep.subr.bf16.mxu0 0
  %1074 = vmatpush1.bf16.msra.mxu0 0
  %1075 = vmatprep.mubr.bf16.mxu0 %v1032
  %1076 = vmatmul.mubr.bf16.gmra.mrb[0].mxu0 %v1019
  %v1077 = vpop.f32.mrb[0].mxu0
  %v1078 = vadd.f32 %v958, %v1077
  %v1079 = vpop.f32.mrb[0].mxu0
  %v1080 = vpop.f32.mrb[0].mxu0
  %v1081 = vadd.f32 %v963, %v1080
  %v1082 = vpop.f32.mrb[0].mxu0
  %1083 = vmatprep.mubr.bf16.mxu0 %v1035
  %1084 = vmatmul.mubr.bf16.gmra.mrb[0].mxu0 %v1021
  %v1085 = vpop.f32.mrb[0].mxu0
  %v1086 = vadd.f32 %v968, %v1085
  %v1087 = vpop.f32.mrb[0].mxu0
  %v1088 = vpop.f32.mrb[0].mxu0
  %v1089 = vadd.f32 %v973, %v1088
  %v1090 = vpop.f32.mrb[0].mxu0
  %1091 = vmatprep.mubr.bf16.mxu0 %v1038
  %1092 = vmatmul.mubr.bf16.gmra.mrb[0].mxu0 %v1023
  %v1093 = vpop.f32.mrb[0].mxu0
  %v1094 = vadd.f32 %v978, %v1093
  %v1095 = vpop.f32.mrb[0].mxu0
  %v1096 = vpop.f32.mrb[0].mxu0
  %v1097 = vadd.f32 %v983, %v1096
  %v1098 = vpop.f32.mrb[0].mxu0
  %1099 = vmatprep.mubr.bf16.mxu0 %v1041
  %1100 = vmatmul.mubr.bf16.gmra.mrb[0].mxu0 %v1025
  %v1101 = vpop.f32.mrb[0].mxu0
  %v1102 = vadd.f32 %v988, %v1101
  %v1103 = vpop.f32.mrb[0].mxu0
  %v1104 = vpop.f32.mrb[0].mxu0
  %v1105 = vadd.f32 %v993, %v1104
  %v1106 = vpop.f32.mrb[0].mxu0
  %1107 = vdwg.mxu0
  %v1108 = vld [vmem:[%s12] sm:$0xf]
  %v1109 = vpack.c.bf16 %v1081, %v1078
  %v1110 = vpack.c.bf16 %v1089, %v1086
  %v1111 = vpack.c.bf16 %v1097, %v1094
  %v1112 = vpack.c.bf16 %v1105, %v1102
  %v1113 = vld [vmem:[%s13] sm:$0xff]
  %1115 = vset.pattern.permute.xlu0 0
  %1116 = vperm.xlu0 %1115, %v1113
  %v1117 = vpop.permute.xlu0 %1116
  %v1120 = vsel %vm400, %v1108, 0
  %1122 = vmatprep.subr.bf16.mxu0 0
  %1123 = vmatpush1.bf16.msra.mxu0 %v1109
  %1124 = vmatprep.subr.bf16.mxu0 0
  %1125 = vmatpush1.bf16.msra.mxu0 %v1110
  %1126 = vmatprep.subr.bf16.mxu0 0
  %1127 = vmatpush1.bf16.msra.mxu0 %v1111
  %1128 = vmatprep.subr.bf16.mxu0 0
  %1129 = vmatpush1.bf16.msra.mxu0 %v1112
  %1130 = vmatprep.subr.bf16.mxu0 0
  %1131 = vmatpush1.bf16.msra.mxu0 0
  %1132 = vmatprep.subr.bf16.mxu0 0
  %1133 = vmatpush1.bf16.msra.mxu0 0
  %1134 = vmatprep.subr.bf16.mxu0 0
  %1135 = vmatpush1.bf16.msra.mxu0 0
  %1136 = vmatprep.subr.bf16.mxu0 0
  %1137 = vmatpush1.bf16.msra.mxu0 0
  %1138 = vmatprep.subr.bf16.mxu0 0
  %1139 = vmatpush1.bf16.msra.mxu0 0
  %1140 = vmatprep.subr.bf16.mxu0 0
  %1141 = vmatpush1.bf16.msra.mxu0 0
  %1142 = vmatprep.subr.bf16.mxu0 0
  %1143 = vmatpush1.bf16.msra.mxu0 0
  %1144 = vmatprep.subr.bf16.mxu0 0
  %1145 = vmatpush1.bf16.msra.mxu0 0
  %1146 = vmatprep.subr.bf16.mxu0 0
  %1147 = vmatpush1.bf16.msra.mxu0 0
  %1148 = vmatprep.subr.bf16.mxu0 0
  %1149 = vmatpush1.bf16.msra.mxu0 0
  %1150 = vmatprep.subr.bf16.mxu0 0
  %1151 = vmatpush1.bf16.msra.mxu0 0
  %1152 = vmatprep.subr.bf16.mxu0 0
  %1153 = vmatpush1.bf16.msra.mxu0 0
  %1154 = vmatprep.mubr.bf16.mxu0 0
  %1155 = vmatmul.mubr.bf16.gmra.mrb[0].mxu0 %v1120
  %v1156 = vpop.f32.mrb[0].mxu0
  %v1157 = vadd.f32 %v1117, %v1156
  %v1158 = vpop.f32.mrb[0].mxu0
  %v1159 = vpop.f32.mrb[0].mxu0
  %v1160 = vpop.f32.mrb[0].mxu0
  %1161 = vdwg.mxu0
  %1162 = vst [vmem:[%s14] sm:$0xff] %v1157
  // Predicated region
  $region58: #{stgcn_forward.1} parent=0 // pred_check
    _
  $region59: #{stgcn_forward.1} parent=0 // pred_check_branch
    %1164 = sbr.rel (0) target = $region61
  $region60: #{stgcn_forward.1} parent=0 // pred_region
    _
  $region61: #{stgcn_forward.1} parent=0 // pred_fallthru
    _
  // Predicated region
  $region62: #{stgcn_forward.1} parent=0 // pred_check
    _
  $region63: #{stgcn_forward.1} parent=0 // pred_check_branch
    %1166 = sbr.rel (0) target = $region65
  $region64: #{stgcn_forward.1} parent=0 // pred_region
    _
  $region65: #{stgcn_forward.1} parent=0 // pred_fallthru
    _

</llo_original>
